<compile_context>
chip_gen: v7x
topology: tpu7x:2x2x1
jax: 0.10.0
libtpu: 0.0.40
codegen_flags: <defaults>
</compile_context>

<pallas_src>
import functools

import jax
import jax.numpy as jnp
from jax.experimental import pallas as pl
from jax.experimental.pallas import tpu as pltpu


def _round_up(x: int, m: int) -> int:
    return (x + m - 1) // m * m


# ----------------------------------------------------------------------------
# Fused kernel: normalize -> log1p -> Linear -> LayerNorm -> ReLU -> Linear
# ----------------------------------------------------------------------------
def _ffn_kernel(x_ref, enc_w_ref, enc_b_ref, gamma_ref, beta_ref,
                dec_w_ref, dec_b_ref, latent_ref, logits_ref,
                *, log_normalize: bool, normalize_total: bool, eps: float):
    # x streamed as bf16 (or narrower); all elementwise math in f32 (v5e-friendly).
    x = x_ref[...].astype(jnp.float32)

    if normalize_total:
        # x = 10000 * x / x.sum(dim=1, keepdim=True)
        # TODO(synk): matches PyTorch exactly (no epsilon) -> all-zero count rows
        # produce inf/NaN, same as the reference module.
        x = 1e4 * x / jnp.sum(x, axis=-1, keepdims=True)
    if log_normalize:
        # x = torch.log(1.0 + x)
        x = jnp.log1p(x)

    # TODO(synk): input/encoder dropout layers are identity here (inference mode).

    # Encoder Linear: bf16 operands -> MXU, f32 accumulation.
    h = jnp.dot(x.astype(jnp.bfloat16), enc_w_ref[...],
                preferred_element_type=jnp.float32) + enc_b_ref[...]

    # LayerNorm over the hidden (lane) axis, two-pass stats, PyTorch eps=1e-5.
    mu = jnp.mean(h, axis=-1, keepdims=True)
    d = h - mu
    var = jnp.mean(d * d, axis=-1, keepdims=True)
    hn = d * jax.lax.rsqrt(var + eps)
    latent = jnp.maximum(hn * gamma_ref[...] + beta_ref[...], 0.0)   # ReLU

    latent_ref[...] = latent.astype(latent_ref.dtype)                # bf16 writeback

    # Decoder: all cell-property heads fused into one lane-padded matmul.
    logits_ref[...] = (
        jnp.dot(latent.astype(jnp.bfloat16), dec_w_ref[...],
                preferred_element_type=jnp.float32)
        + dec_b_ref[...]
    )


# ----------------------------------------------------------------------------
# pallas_call builder (single- vs double-buffered resident weights)
# ----------------------------------------------------------------------------
def _build_and_run(x, params, *, kern, tile_m, grid, n, n_input, n_hidden,
                   n_out_pad, vmem_limit, single_buffer_weights):
    if single_buffer_weights:
        def resident(shape):
            # Constant block index + single buffer: one copy stays resident in VMEM.
            return pl.BlockSpec(shape, lambda i: (0, 0),
                                pipeline_mode=pl.Buffered(1))
    else:
        def resident(shape):
            return pl.BlockSpec(shape, lambda i: (0, 0))

    return pl.pallas_call(
        kern,
        out_shape=(
            jax.ShapeDtypeStruct((n, n_hidden), jnp.bfloat16),   # latent (bf16)
            jax.ShapeDtypeStruct((n, n_out_pad), jnp.float32),   # fused head logits
        ),
        grid=grid,
        in_specs=[
            pl.BlockSpec((tile_m, n_input), lambda i: (i, 0)),   # x tile (bf16)
            resident((n_input, n_hidden)),                       # enc_w (bf16)
            resident((1, n_hidden)),                             # enc_b
            resident((1, n_hidden)),                             # ln_gamma
            resident((1, n_hidden)),                             # ln_beta
            resident((n_hidden, n_out_pad)),                     # dec_w (bf16)
            resident((1, n_out_pad)),                            # dec_b
        ],
        out_specs=(
            pl.BlockSpec((tile_m, n_hidden), lambda i: (i, 0)),
            pl.BlockSpec((tile_m, n_out_pad), lambda i: (i, 0)),
        ),
        compiler_params=pltpu.CompilerParams(
            dimension_semantics=("parallel",),      # v7x: shard rows over 2 TCs
            vmem_limit_bytes=vmem_limit,
        ),
    )(x, params["enc_w"], params["enc_b"], params["ln_gamma"],
      params["ln_beta"], params["dec_w"], params["dec_b"])


# ----------------------------------------------------------------------------
# Wrapper: VMEM-budget-derived row tiling, resident weights, no HBM pad copy
# ----------------------------------------------------------------------------
def feedforward_fused(x, params, *, log_normalize, normalize_total,
                      max_tile_m=1024):
    n, n_input = x.shape
    n_hidden = params["enc_w"].shape[1]
    n_out_pad = params["dec_w"].shape[1]

    # Narrow the dominant HBM stream: stream x as bf16, upcast to f32 in-kernel.
    # TODO(synk): ideally the producer already emits bf16 so this cast fuses away.
    if x.dtype == jnp.float32:
        x = x.astype(jnp.bfloat16)
    x_bytes = x.dtype.itemsize

    # ---- chip-aware VMEM budget ------------------------------------------
    try:
        info = pltpu.get_tpu_info()
        vmem_cap = int(getattr(info, "vmem_capacity_bytes", 64 << 20))
    except Exception:
        vmem_cap = 64 << 20                       # conservative (v7x per-TC)
    headroom = 8 << 20
    budget = max(vmem_cap - headroom, 16 << 20)

    # Resident weights/biases (counted x2 to stay safe under the double-buffer
    # fallback path); per-row streaming footprint (double-buffered tiles).
    weight_bytes = 2 * ((n_input * n_hidden + n_hidden * n_out_pad) * 2
                        + 8 * (3 * n_hidden + n_out_pad) * 4)
    per_row_bytes = 2 * (n_input * x_bytes       # x tile (bf16)
                         + n_hidden * 2          # latent tile (bf16)
                         + n_out_pad * 4)        # logits tile (f32)

    # TODO(synk): if enc_w alone approaches the VMEM budget (huge n_input on
    # v7x), add an innermost "arbitrary" K grid axis with an f32 accumulator
    # instead of keeping enc_w fully resident.
    tile_budget = max((budget - weight_bytes) // per_row_bytes, 8)

    tile_m = max(8, (min(max_tile_m, tile_budget) // 8) * 8)
    tile_m = min(tile_m, _round_up(n, 8))
    # Guarantee >=2 grid steps when possible so v7x's 2 TCs both get work.
    if n >= 16:
        tile_m = min(tile_m, _round_up(pl.cdiv(n, 2), 8))

    grid = (pl.cdiv(n, tile_m),)    # partial last block; no jnp.pad HBM copy

    need = weight_bytes + tile_m * per_row_bytes
    vmem_limit = int(min(max(need + (8 << 20), 32 << 20),
                         max(vmem_cap - (4 << 20), 16 << 20)))

    kern = functools.partial(
        _ffn_kernel,
        log_normalize=log_normalize,
        normalize_total=normalize_total,
        eps=1e-5,
    )

    common = dict(kern=kern, tile_m=tile_m, grid=grid, n=n, n_input=n_input,
                  n_hidden=n_hidden, n_out_pad=n_out_pad, vmem_limit=vmem_limit)
    try:
        latent, logits = _build_and_run(x, params, single_buffer_weights=True,
                                        **common)
    except Exception:
        # TODO(synk): pl.Buffered(1) pipeline_mode unsupported on this JAX
        # version; fall back to default double-buffered resident weights.
        latent, logits = _build_and_run(x, params, single_buffer_weights=False,
                                        **common)
    return latent, logits


def feedforward_network_forward(x, batch_labels, batch_mask, params,
                                cell_properties,
                                *, log_normalize=True, normalize_total=False):
    # batch_labels / batch_mask are unused because batch_properties=None
    # (FCLayers then ignores batch covariates), matching the module defaults.
    del batch_labels, batch_mask

    latent, logits_all = feedforward_fused(
        x, params,
        log_normalize=log_normalize,
        normalize_total=normalize_total,
    )

    # Split the concatenated (lane-padded) head outputs into per-property logits;
    # padded columns beyond sum(cell_properties.values()) are dropped here.
    out = {}
    off = 0
    for name, n_cls in cell_properties.items():
        out[name] = logits_all[:, off:off + n_cls]
        off += n_cls
    return out, latent


# ----------------------------------------------------------------------------
# Deterministic parameter construction (bf16 weight matrices, f32 everything else)
# ----------------------------------------------------------------------------
def init_params(key, n_input, n_hidden, cell_properties, *, lane_pad=128):
    k1, k2, k3, k4 = jax.random.split(key, 4)
    total_out = sum(cell_properties.values())
    total_out_pad = _round_up(total_out, lane_pad)

    scale_in = 1.0 / (n_input ** 0.5)
    scale_h = 1.0 / (n_hidden ** 0.5)

    enc_w = jax.random.uniform(k1, (n_input, n_hidden), jnp.float32,
                               -scale_in, scale_in)
    dec_w = jax.random.uniform(k3, (n_hidden, total_out), jnp.float32,
                               -scale_h, scale_h)
    dec_w = jnp.pad(dec_w, ((0, 0), (0, total_out_pad - total_out)))
    dec_b = jax.random.uniform(k4, (1, total_out), jnp.float32,
                               -scale_h, scale_h)
    dec_b = jnp.pad(dec_b, ((0, 0), (0, total_out_pad - total_out)))

    return {
        "enc_w": enc_w.astype(jnp.bfloat16),
        "enc_b": jax.random.uniform(k2, (1, n_hidden), jnp.float32,
                                    -scale_in, scale_in),
        "ln_gamma": jnp.ones((1, n_hidden), jnp.float32),
        "ln_beta": jnp.zeros((1, n_hidden), jnp.float32),
        "dec_w": dec_w.astype(jnp.bfloat16),
        "dec_b": dec_b,
    }


# ----------------------------------------------------------------------------
# Main
# ----------------------------------------------------------------------------
if __name__ == "__main__":
    key = jax.random.PRNGKey(0)
    kx, kp, kl = jax.random.split(key, 3)

    n_cells = 64           # batch of cells (>=2 row tiles -> exercises the grid)
    n_input = 256          # gene / feature dimension (lane-aligned)
    n_hidden = 128         # encoder hidden width (module default)
    cell_properties = {"cell_type": 5, "sex": 2}   # synthetic discrete heads
    total_out = sum(cell_properties.values())

    # Count-like nonnegative inputs.
    x = jax.random.uniform(kx, (n_cells, n_input), jnp.float32, 0.0, 10.0)
    batch_labels = jax.random.randint(kl, (n_cells,), 0, 3)
    batch_mask = jnp.ones((n_cells,), jnp.float32)

    params = init_params(kp, n_input, n_hidden, cell_properties)

    logits, latent = feedforward_network_forward(
        x, batch_labels, batch_mask, params, cell_properties,
        log_normalize=True, normalize_total=False,
    )
    jax.block_until_ready(latent)
    for v in logits.values():
        jax.block_until_ready(v)

    # Pure-JAX reference, precision-matched to the kernel (bf16 x / matmul
    # operands, f32 accumulation, two-pass LayerNorm stats).
    xr = jnp.log1p(x.astype(jnp.bfloat16).astype(jnp.float32))
    h = jnp.dot(xr.astype(jnp.bfloat16), params["enc_w"],
                preferred_element_type=jnp.float32) + params["enc_b"]
    mu = h.mean(-1, keepdims=True)
    d = h - mu
    var = (d * d).mean(-1, keepdims=True)
    ref_latent = jnp.maximum(
        d * jax.lax.rsqrt(var + 1e-5) * params["ln_gamma"]
        + params["ln_beta"], 0.0)
    ref_logits_full = jnp.dot(ref_latent.astype(jnp.bfloat16), params["dec_w"],
                              preferred_element_type=jnp.float32) + params["dec_b"]
    ref_logits = ref_logits_full[:, :total_out]

    got_logits = jnp.concatenate([logits["cell_type"], logits["sex"]], axis=-1)
    assert latent.shape == (n_cells, n_hidden)
    assert latent.dtype == jnp.bfloat16
    assert logits["cell_type"].shape == (n_cells, 5)
    assert logits["sex"].shape == (n_cells, 2)
    assert jnp.allclose(latent.astype(jnp.float32), ref_latent,
                        atol=1e-2, rtol=1e-2)
    assert jnp.allclose(got_logits, ref_logits, atol=2e-2, rtol=2e-2)

    print("KERNEL_OK")
</pallas_src>

<mosaic_0001>
module attributes {stable_mosaic.version = 11 : i64} {
  func.func @_ffn_kernel(%arg0: i32, %arg1: memref<32x256xbf16, #tpu.memory_space<vmem>>, %arg2: memref<256x128xbf16, #tpu.memory_space<vmem>>, %arg3: memref<1x128xf32, #tpu.memory_space<vmem>>, %arg4: memref<1x128xf32, #tpu.memory_space<vmem>>, %arg5: memref<1x128xf32, #tpu.memory_space<vmem>>, %arg6: memref<128x128xbf16, #tpu.memory_space<vmem>>, %arg7: memref<1x128xf32, #tpu.memory_space<vmem>>, %arg8: memref<32x128xbf16, #tpu.memory_space<vmem>>, %arg9: memref<32x128xf32, #tpu.memory_space<vmem>>) attributes {dimension_semantics = [#tpu.dimension_semantics<parallel>], iteration_bounds = array<i64: 2>, scalar_prefetch = 0 : i64, scratch_operands = 0 : i64, tpu.core_type = #tpu.core_type<tc>, window_params = [{transform_indices = @transform_0, window_bounds = array<i64: 32, 256>}, {pipeline_mode = #tpu.pipeline_mode<synchronous>, transform_indices = @transform_1, window_bounds = array<i64: 256, 128>}, {pipeline_mode = #tpu.pipeline_mode<synchronous>, transform_indices = @transform_2, window_bounds = array<i64: 1, 128>}, {pipeline_mode = #tpu.pipeline_mode<synchronous>, transform_indices = @transform_3, window_bounds = array<i64: 1, 128>}, {pipeline_mode = #tpu.pipeline_mode<synchronous>, transform_indices = @transform_4, window_bounds = array<i64: 1, 128>}, {pipeline_mode = #tpu.pipeline_mode<synchronous>, transform_indices = @transform_5, window_bounds = array<i64: 128, 128>}, {pipeline_mode = #tpu.pipeline_mode<synchronous>, transform_indices = @transform_6, window_bounds = array<i64: 1, 128>}, {transform_indices = @transform_7, window_bounds = array<i64: 32, 128>}, {transform_indices = @transform_8, window_bounds = array<i64: 32, 128>}]} {
    %c0 = arith.constant 0 : index
    %c0_0 = arith.constant 0 : index
    %0 = vector.load %arg1[%c0, %c0_0] : memref<32x256xbf16, #tpu.memory_space<vmem>>, vector<32x256xbf16>
    %1 = arith.extf %0 : vector<32x256xbf16> to vector<32x256xf32>
    %2 = math.log1p %1 : vector<32x256xf32>
    %3 = arith.truncf %2 : vector<32x256xf32> to vector<32x256xbf16>
    %c0_1 = arith.constant 0 : index
    %c0_2 = arith.constant 0 : index
    %4 = vector.load %arg2[%c0_1, %c0_2] : memref<256x128xbf16, #tpu.memory_space<vmem>>, vector<256x128xbf16>
    %cst = arith.constant dense<0.000000e+00> : vector<32x128xf32>
    %5 = tpu.matmul %3, %4, %cst {dimension_numbers = #tpu.dot_dimension_numbers<[1], [0], [0], [1], [0, 0, 1, 1], [], []>} : vector<32x256xbf16>, vector<256x128xbf16>, vector<32x128xf32> -> vector<32x128xf32>
    %c0_3 = arith.constant 0 : index
    %c0_4 = arith.constant 0 : index
    %6 = vector.load %arg3[%c0_3, %c0_4] : memref<1x128xf32, #tpu.memory_space<vmem>>, vector<1x128xf32>
    %7 = vector.broadcast %6 : vector<1x128xf32> to vector<32x128xf32>
    %8 = arith.addf %5, %7 : vector<32x128xf32>
    %cst_5 = arith.constant dense<0.000000e+00> : vector<32xf32>
    %9 = vector.multi_reduction <add>, %8, %cst_5 [1] : vector<32x128xf32> to vector<32xf32>
    %10 = vector.shape_cast %9 : vector<32xf32> to vector<32x1xf32>
    %cst_6 = arith.constant 1.280000e+02 : f32
    %11 = vector.broadcast %cst_6 : f32 to vector<32x1xf32>
    %12 = arith.divf %10, %11 : vector<32x1xf32>
    %13 = vector.broadcast %12 : vector<32x1xf32> to vector<32x128xf32>
    %14 = arith.subf %8, %13 : vector<32x128xf32>
    %15 = arith.mulf %14, %14 : vector<32x128xf32>
    %cst_7 = arith.constant dense<0.000000e+00> : vector<32xf32>
    %16 = vector.multi_reduction <add>, %15, %cst_7 [1] : vector<32x128xf32> to vector<32xf32>
    %17 = vector.shape_cast %16 : vector<32xf32> to vector<32x1xf32>
    %cst_8 = arith.constant 1.280000e+02 : f32
    %18 = vector.broadcast %cst_8 : f32 to vector<32x1xf32>
    %19 = arith.divf %17, %18 : vector<32x1xf32>
    %cst_9 = arith.constant 9.99999974E-6 : f32
    %20 = vector.broadcast %cst_9 : f32 to vector<32x1xf32>
    %21 = arith.addf %19, %20 : vector<32x1xf32>
    %22 = math.rsqrt %21 : vector<32x1xf32>
    %23 = vector.broadcast %22 : vector<32x1xf32> to vector<32x128xf32>
    %24 = arith.mulf %14, %23 : vector<32x128xf32>
    %c0_10 = arith.constant 0 : index
    %c0_11 = arith.constant 0 : index
    %25 = vector.load %arg4[%c0_10, %c0_11] : memref<1x128xf32, #tpu.memory_space<vmem>>, vector<1x128xf32>
    %26 = vector.broadcast %25 : vector<1x128xf32> to vector<32x128xf32>
    %27 = arith.mulf %24, %26 : vector<32x128xf32>
    %c0_12 = arith.constant 0 : index
    %c0_13 = arith.constant 0 : index
    %28 = vector.load %arg5[%c0_12, %c0_13] : memref<1x128xf32, #tpu.memory_space<vmem>>, vector<1x128xf32>
    %29 = vector.broadcast %28 : vector<1x128xf32> to vector<32x128xf32>
    %30 = arith.addf %27, %29 : vector<32x128xf32>
    %cst_14 = arith.constant 0.000000e+00 : f32
    %31 = vector.broadcast %cst_14 : f32 to vector<32x128xf32>
    %32 = arith.maximumf %30, %31 : vector<32x128xf32>
    %33 = arith.truncf %32 : vector<32x128xf32> to vector<32x128xbf16>
    %c0_15 = arith.constant 0 : index
    %c0_16 = arith.constant 0 : index
    %34 = vector.load %arg8[%c0_15, %c0_16] : memref<32x128xbf16, #tpu.memory_space<vmem>>, vector<32x128xbf16>
    tpu.vector_store %arg8[%c0_15, %c0_16], %33 {strides = array<i32>} : memref<32x128xbf16, #tpu.memory_space<vmem>>, vector<32x128xbf16>,
    %35 = arith.truncf %32 : vector<32x128xf32> to vector<32x128xbf16>
    %c0_17 = arith.constant 0 : index
    %c0_18 = arith.constant 0 : index
    %36 = vector.load %arg6[%c0_17, %c0_18] : memref<128x128xbf16, #tpu.memory_space<vmem>>, vector<128x128xbf16>
    %cst_19 = arith.constant dense<0.000000e+00> : vector<32x128xf32>
    %37 = tpu.matmul %35, %36, %cst_19 {dimension_numbers = #tpu.dot_dimension_numbers<[1], [0], [0], [1], [0, 0, 1, 1], [], []>} : vector<32x128xbf16>, vector<128x128xbf16>, vector<32x128xf32> -> vector<32x128xf32>
    %c0_20 = arith.constant 0 : index
    %c0_21 = arith.constant 0 : index
    %38 = vector.load %arg7[%c0_20, %c0_21] : memref<1x128xf32, #tpu.memory_space<vmem>>, vector<1x128xf32>
    %39 = vector.broadcast %38 : vector<1x128xf32> to vector<32x128xf32>
    %40 = arith.addf %37, %39 : vector<32x128xf32>
    %c0_22 = arith.constant 0 : index
    %c0_23 = arith.constant 0 : index
    %41 = vector.load %arg9[%c0_22, %c0_23] : memref<32x128xf32, #tpu.memory_space<vmem>>, vector<32x128xf32>
    tpu.vector_store %arg9[%c0_22, %c0_23], %40 {strides = array<i32>} : memref<32x128xf32, #tpu.memory_space<vmem>>, vector<32x128xf32>,
    return
  }
  func.func @transform_0(%arg0: i32) -> (i32, i32) {
    %c0_i32 = arith.constant 0 : i32
    %c0_i32_0 = arith.constant 0 : i32
    return %arg0, %c0_i32 : i32, i32
  }
  func.func @transform_1(%arg0: i32) -> (i32, i32) {
    %c0_i32 = arith.constant 0 : i32
    %c0_i32_0 = arith.constant 0 : i32
    %c0_i32_1 = arith.constant 0 : i32
    return %c0_i32, %c0_i32_0 : i32, i32
  }
  func.func @transform_2(%arg0: i32) -> (i32, i32) {
    %c0_i32 = arith.constant 0 : i32
    %c0_i32_0 = arith.constant 0 : i32
    %c0_i32_1 = arith.constant 0 : i32
    return %c0_i32, %c0_i32_0 : i32, i32
  }
  func.func @transform_3(%arg0: i32) -> (i32, i32) {
    %c0_i32 = arith.constant 0 : i32
    %c0_i32_0 = arith.constant 0 : i32
    %c0_i32_1 = arith.constant 0 : i32
    return %c0_i32, %c0_i32_0 : i32, i32
  }
  func.func @transform_4(%arg0: i32) -> (i32, i32) {
    %c0_i32 = arith.constant 0 : i32
    %c0_i32_0 = arith.constant 0 : i32
    %c0_i32_1 = arith.constant 0 : i32
    return %c0_i32, %c0_i32_0 : i32, i32
  }
  func.func @transform_5(%arg0: i32) -> (i32, i32) {
    %c0_i32 = arith.constant 0 : i32
    %c0_i32_0 = arith.constant 0 : i32
    %c0_i32_1 = arith.constant 0 : i32
    return %c0_i32, %c0_i32_0 : i32, i32
  }
  func.func @transform_6(%arg0: i32) -> (i32, i32) {
    %c0_i32 = arith.constant 0 : i32
    %c0_i32_0 = arith.constant 0 : i32
    %c0_i32_1 = arith.constant 0 : i32
    return %c0_i32, %c0_i32_0 : i32, i32
  }
  func.func @transform_7(%arg0: i32) -> (i32, i32) {
    %c0_i32 = arith.constant 0 : i32
    %c0_i32_0 = arith.constant 0 : i32
    return %arg0, %c0_i32 : i32, i32
  }
  func.func @transform_8(%arg0: i32) -> (i32, i32) {
    %c0_i32 = arith.constant 0 : i32
    %c0_i32_0 = arith.constant 0 : i32
    return %arg0, %c0_i32 : i32, i32
  }
}

module attributes {stable_mosaic.version = 11 : i64} {
  func.func @_ffn_kernel(%arg0: i32, %arg1: memref<32x256xbf16, #tpu.memory_space<vmem>>, %arg2: memref<256x128xbf16, #tpu.memory_space<vmem>>, %arg3: memref<1x128xf32, #tpu.memory_space<vmem>>, %arg4: memref<1x128xf32, #tpu.memory_space<vmem>>, %arg5: memref<1x128xf32, #tpu.memory_space<vmem>>, %arg6: memref<128x128xbf16, #tpu.memory_space<vmem>>, %arg7: memref<1x128xf32, #tpu.memory_space<vmem>>, %arg8: memref<32x128xbf16, #tpu.memory_space<vmem>>, %arg9: memref<32x128xf32, #tpu.memory_space<vmem>>) attributes {dimension_semantics = [#tpu.dimension_semantics<parallel>], iteration_bounds = array<i64: 2>, scalar_prefetch = 0 : i64, scratch_operands = 0 : i64, tpu.core_type = #tpu.core_type<tc>, window_params = [{transform_indices = @transform_0, window_bounds = array<i64: 32, 256>}, {pipeline_mode = #tpu.pipeline_mode<synchronous>, transform_indices = @transform_1, window_bounds = array<i64: 256, 128>}, {pipeline_mode = #tpu.pipeline_mode<synchronous>, transform_indices = @transform_2, window_bounds = array<i64: 1, 128>}, {pipeline_mode = #tpu.pipeline_mode<synchronous>, transform_indices = @transform_3, window_bounds = array<i64: 1, 128>}, {pipeline_mode = #tpu.pipeline_mode<synchronous>, transform_indices = @transform_4, window_bounds = array<i64: 1, 128>}, {pipeline_mode = #tpu.pipeline_mode<synchronous>, transform_indices = @transform_5, window_bounds = array<i64: 128, 128>}, {pipeline_mode = #tpu.pipeline_mode<synchronous>, transform_indices = @transform_6, window_bounds = array<i64: 1, 128>}, {transform_indices = @transform_7, window_bounds = array<i64: 32, 128>}, {transform_indices = @transform_8, window_bounds = array<i64: 32, 128>}]} {
    %c0 = arith.constant 0 : index
    %c0_0 = arith.constant 0 : index
    %0 = vector.load %arg1[%c0, %c0_0] : memref<32x256xbf16, #tpu.memory_space<vmem>>, vector<32x256xbf16>
    %1 = arith.extf %0 : vector<32x256xbf16> to vector<32x256xf32>
    %2 = math.log1p %1 : vector<32x256xf32>
    %3 = arith.truncf %2 : vector<32x256xf32> to vector<32x256xbf16>
    %c0_1 = arith.constant 0 : index
    %c0_2 = arith.constant 0 : index
    %4 = vector.load %arg2[%c0_1, %c0_2] : memref<256x128xbf16, #tpu.memory_space<vmem>>, vector<256x128xbf16>
    %cst = arith.constant dense<0.000000e+00> : vector<32x128xf32>
    %5 = tpu.matmul %3, %4, %cst {dimension_numbers = #tpu.dot_dimension_numbers<[1], [0], [0], [1], [0, 0, 1, 1], [], []>} : vector<32x256xbf16>, vector<256x128xbf16>, vector<32x128xf32> -> vector<32x128xf32>
    %c0_3 = arith.constant 0 : index
    %c0_4 = arith.constant 0 : index
    %6 = vector.load %arg3[%c0_3, %c0_4] : memref<1x128xf32, #tpu.memory_space<vmem>>, vector<1x128xf32>
    %7 = vector.broadcast %6 : vector<1x128xf32> to vector<32x128xf32>
    %8 = arith.addf %5, %7 : vector<32x128xf32>
    %cst_5 = arith.constant dense<0.000000e+00> : vector<32xf32>
    %9 = vector.multi_reduction <add>, %8, %cst_5 [1] : vector<32x128xf32> to vector<32xf32>
    %10 = vector.shape_cast %9 : vector<32xf32> to vector<32x1xf32>
    %cst_6 = arith.constant 1.280000e+02 : f32
    %11 = vector.broadcast %cst_6 : f32 to vector<32x1xf32>
    %12 = arith.divf %10, %11 : vector<32x1xf32>
    %13 = vector.broadcast %12 : vector<32x1xf32> to vector<32x128xf32>
    %14 = arith.subf %8, %13 : vector<32x128xf32>
    %15 = arith.mulf %14, %14 : vector<32x128xf32>
    %cst_7 = arith.constant dense<0.000000e+00> : vector<32xf32>
    %16 = vector.multi_reduction <add>, %15, %cst_7 [1] : vector<32x128xf32> to vector<32xf32>
    %17 = vector.shape_cast %16 : vector<32xf32> to vector<32x1xf32>
    %cst_8 = arith.constant 1.280000e+02 : f32
    %18 = vector.broadcast %cst_8 : f32 to vector<32x1xf32>
    %19 = arith.divf %17, %18 : vector<32x1xf32>
    %cst_9 = arith.constant 9.99999974E-6 : f32
    %20 = vector.broadcast %cst_9 : f32 to vector<32x1xf32>
    %21 = arith.addf %19, %20 : vector<32x1xf32>
    %22 = math.rsqrt %21 : vector<32x1xf32>
    %23 = vector.broadcast %22 : vector<32x1xf32> to vector<32x128xf32>
    %24 = arith.mulf %14, %23 : vector<32x128xf32>
    %c0_10 = arith.constant 0 : index
    %c0_11 = arith.constant 0 : index
    %25 = vector.load %arg4[%c0_10, %c0_11] : memref<1x128xf32, #tpu.memory_space<vmem>>, vector<1x128xf32>
    %26 = vector.broadcast %25 : vector<1x128xf32> to vector<32x128xf32>
    %27 = arith.mulf %24, %26 : vector<32x128xf32>
    %c0_12 = arith.constant 0 : index
    %c0_13 = arith.constant 0 : index
    %28 = vector.load %arg5[%c0_12, %c0_13] : memref<1x128xf32, #tpu.memory_space<vmem>>, vector<1x128xf32>
    %29 = vector.broadcast %28 : vector<1x128xf32> to vector<32x128xf32>
    %30 = arith.addf %27, %29 : vector<32x128xf32>
    %cst_14 = arith.constant 0.000000e+00 : f32
    %31 = vector.broadcast %cst_14 : f32 to vector<32x128xf32>
    %32 = arith.maximumf %30, %31 : vector<32x128xf32>
    %33 = arith.truncf %32 : vector<32x128xf32> to vector<32x128xbf16>
    %c0_15 = arith.constant 0 : index
    %c0_16 = arith.constant 0 : index
    %34 = vector.load %arg8[%c0_15, %c0_16] : memref<32x128xbf16, #tpu.memory_space<vmem>>, vector<32x128xbf16>
    tpu.vector_store %arg8[%c0_15, %c0_16], %33 {strides = array<i32>} : memref<32x128xbf16, #tpu.memory_space<vmem>>, vector<32x128xbf16>,
    %35 = arith.truncf %32 : vector<32x128xf32> to vector<32x128xbf16>
    %c0_17 = arith.constant 0 : index
    %c0_18 = arith.constant 0 : index
    %36 = vector.load %arg6[%c0_17, %c0_18] : memref<128x128xbf16, #tpu.memory_space<vmem>>, vector<128x128xbf16>
    %cst_19 = arith.constant dense<0.000000e+00> : vector<32x128xf32>
    %37 = tpu.matmul %35, %36, %cst_19 {dimension_numbers = #tpu.dot_dimension_numbers<[1], [0], [0], [1], [0, 0, 1, 1], [], []>} : vector<32x128xbf16>, vector<128x128xbf16>, vector<32x128xf32> -> vector<32x128xf32>
    %c0_20 = arith.constant 0 : index
    %c0_21 = arith.constant 0 : index
    %38 = vector.load %arg7[%c0_20, %c0_21] : memref<1x128xf32, #tpu.memory_space<vmem>>, vector<1x128xf32>
    %39 = vector.broadcast %38 : vector<1x128xf32> to vector<32x128xf32>
    %40 = arith.addf %37, %39 : vector<32x128xf32>
    %c0_22 = arith.constant 0 : index
    %c0_23 = arith.constant 0 : index
    %41 = vector.load %arg9[%c0_22, %c0_23] : memref<32x128xf32, #tpu.memory_space<vmem>>, vector<32x128xf32>
    tpu.vector_store %arg9[%c0_22, %c0_23], %40 {strides = array<i32>} : memref<32x128xf32, #tpu.memory_space<vmem>>, vector<32x128xf32>,
    return
  }
  func.func @transform_0(%arg0: i32) -> (i32, i32) {
    %c0_i32 = arith.constant 0 : i32
    %c0_i32_0 = arith.constant 0 : i32
    return %arg0, %c0_i32 : i32, i32
  }
  func.func @transform_1(%arg0: i32) -> (i32, i32) {
    %c0_i32 = arith.constant 0 : i32
    %c0_i32_0 = arith.constant 0 : i32
    %c0_i32_1 = arith.constant 0 : i32
    return %c0_i32, %c0_i32_0 : i32, i32
  }
  func.func @transform_2(%arg0: i32) -> (i32, i32) {
    %c0_i32 = arith.constant 0 : i32
    %c0_i32_0 = arith.constant 0 : i32
    %c0_i32_1 = arith.constant 0 : i32
    return %c0_i32, %c0_i32_0 : i32, i32
  }
  func.func @transform_3(%arg0: i32) -> (i32, i32) {
    %c0_i32 = arith.constant 0 : i32
    %c0_i32_0 = arith.constant 0 : i32
    %c0_i32_1 = arith.constant 0 : i32
    return %c0_i32, %c0_i32_0 : i32, i32
  }
  func.func @transform_4(%arg0: i32) -> (i32, i32) {
    %c0_i32 = arith.constant 0 : i32
    %c0_i32_0 = arith.constant 0 : i32
    %c0_i32_1 = arith.constant 0 : i32
    return %c0_i32, %c0_i32_0 : i32, i32
  }
  func.func @transform_5(%arg0: i32) -> (i32, i32) {
    %c0_i32 = arith.constant 0 : i32
    %c0_i32_0 = arith.constant 0 : i32
    %c0_i32_1 = arith.constant 0 : i32
    return %c0_i32, %c0_i32_0 : i32, i32
  }
  func.func @transform_6(%arg0: i32) -> (i32, i32) {
    %c0_i32 = arith.constant 0 : i32
    %c0_i32_0 = arith.constant 0 : i32
    %c0_i32_1 = arith.constant 0 : i32
    return %c0_i32, %c0_i32_0 : i32, i32
  }
  func.func @transform_7(%arg0: i32) -> (i32, i32) {
    %c0_i32 = arith.constant 0 : i32
    %c0_i32_0 = arith.constant 0 : i32
    return %arg0, %c0_i32 : i32, i32
  }
  func.func @transform_8(%arg0: i32) -> (i32, i32) {
    %c0_i32 = arith.constant 0 : i32
    %c0_i32_0 = arith.constant 0 : i32
    return %arg0, %c0_i32 : i32, i32
  }
}

</mosaic_0001>

<llo_original>
// kernel: tpu_custom_call.1
$region0: #{tpu_custom_call.1}
  #allocation0 [shape = 'u32[]', space=smem, size = 0x4, offset = 0x4, fixed_abs, tag = 'smem constant byte address 0x4 - core index']
  #allocation1 [shape = 'u32[144,128]{1,0:T(1,128)}', space=vmem, size = 0x12000, scoped, tag = 'internal scratch']
  %s0 = inlined_call_operand.hbm [shape: bf16[64,256], index: 0, kind: input, shape index: {}]
  %s1 = inlined_call_operand.hbm [shape: bf16[256,128], index: 1, kind: input, shape index: {}]
  %s2 = inlined_call_operand.vmem [shape: f32[1,128], index: 2, kind: input, shape index: {}]
  %s3 = inlined_call_operand.vmem [shape: f32[1,128], index: 3, kind: input, shape index: {}]
  %s4 = inlined_call_operand.vmem [shape: f32[1,128], index: 4, kind: input, shape index: {}]
  %s5 = inlined_call_operand.hbm [shape: bf16[128,128], index: 5, kind: input, shape index: {}]
  %s6 = inlined_call_operand.vmem [shape: f32[1,128], index: 6, kind: input, shape index: {}]
  %s7 = inlined_call_operand.hbm [shape: bf16[64,128], index: 7, kind: output, shape index: {0}]
  %s8 = inlined_call_operand.hbm [shape: f32[64,128], index: 8, kind: output, shape index: {1}]
  %9 = xla_tuple %s7, %s8
  %s10 = sld [smem:[#allocation0]]
  $region81: #{tpu_custom_call.1} parent=0
    _
  %s12 = ssub.s32 1, %s10
  %s13 = scalar_select 0, %s12, %s10
  $region1: #{tpu_custom_call.1} parent=0
    #allocation2 [shape = 'u8[32768]{0}', space=vmem, size = 0x8000, scoped, tag = 'input window, operand 0']
    #allocation3 [shape = 's32[2]{0}', space=sflag, size = 0x8, scoped, tag = 'scoped memory for tpu_custom_call.1']
    #allocation4 [shape = 's32[2]{0}', space=sflag, size = 0x8, scoped, tag = 'scoped memory for tpu_custom_call.1']
    #allocation5 [shape = 'u8[65536]{0}', space=vmem, size = 0x10000, scoped, tag = 'input window, operand 1, single buffered']
    #allocation6 [shape = 's32[1]{0}', space=sflag, size = 0x4, scoped, tag = 'scoped memory for tpu_custom_call.1']
    #allocation7 [shape = 'u8[32768]{0}', space=vmem, size = 0x8000, scoped, tag = 'input window, operand 5, single buffered']
    #allocation8 [shape = 'u8[16384]{0}', space=vmem, size = 0x4000, scoped, tag = 'output window, operand 0']
    #allocation9 [shape = 'u8[32768]{0}', space=vmem, size = 0x8000, scoped, tag = 'output window, operand 1']
    #allocation10 [shape = 's32[2]{0}', space=sflag, size = 0x8, scoped, tag = 'scoped memory for tpu_custom_call.1']
    %14 = vsyncpa [#allocation3], 0
    %s15 = scalar_lea.sflag [#allocation3], 1
    %16 = vsyncpa %s15, 0
    %17 = vsyncpa [#allocation6], 0
    %18 = vsyncpa [#allocation4], 0
    %s19 = scalar_lea.sflag [#allocation4], 1
    %20 = vsyncpa %s19, 0
    %21 = vsyncpa [#allocation10], 0
    %s22 = scalar_lea.sflag [#allocation10], 1
    %23 = vsyncpa %s22, 0
    loop: start=0, step=1, limit=4
    $region2: #{tpu_custom_call.1} parent=1 // loop_pre_header
      _
    $region3: #{tpu_custom_call.1} parent=1 // loop_header
      %s25 = sphi 0, %s29
      %p26 = scmp.ge.s32.totalorder %s25, 4
      %s35 = sphi 0, %s37
      %s38 = sphi 0, %s35
      %s39 = sphi 0, %s38
      %s55 = sphi 0, %s39
      %s59 = sphi 0, %s59
      %s61 = sphi 0, %s59
      %s62 = sphi 0, %s61
      %s76 = sphi 0, %s62
      %s80 = sphi 0, %s80
      %s82 = sphi 0, %s80
      %s83 = sphi 0, %s82
      %s97 = sphi 0, %s83
      %s101 = sphi 0, %s101
      %s103 = sphi 0, %s101
      %s104 = sphi 0, %s103
      %s118 = sphi 0, %s104
      %s122 = sphi 0, %s122
      %s124 = sphi 0, %s122
      %s125 = sphi 0, %s124
      %s139 = sphi 0, %s125
      %s143 = sphi 0, %s143
      %s145 = sphi 0, %s143
      %s146 = sphi 0, %s145
      %s160 = sphi 0, %s146
      %s164 = sphi 0, %s164
      %s166 = sphi 0, %s164
      %s167 = sphi 0, %s166
      %s181 = sphi 0, %s167
      %s187 = sphi 0, %s189
      %s190 = sphi 0, %s187
      %s191 = sphi 0, %s190
      %s207 = sphi 0, %s191
      %s213 = sphi 0, %s215
      %s216 = sphi 0, %s213
      %s217 = sphi 0, %s216
      %s233 = sphi 0, %s217
    $region4: #{tpu_custom_call.1} parent=1 // loop_header_branch
      %28 = sbr.rel (%p26) target = $region8
    $region5: #{tpu_custom_call.1} parent=1 // loop_body
      %s30 = ssub.s32 %s25, 1
      %s31 = ssub.s32 %s25, 2
      %s32 = sadd.s32 %s25, 1
      %s33 = ssub.s32 %s25, %s32
      %p34 = scmp.eq.s32.totalorder %s33, 0
      %s36 = sadd.s32 %s35, 1
      %s37 = scalar_select %p34, %s35, %s36
      %p40 = pneg %p34
      %p41 = scmp.eq.s32.totalorder %s25, 1
      %p42 = por %p40, %p41
      %p43 = scmp.ne.s32.totalorder %s35, %s38
      %p44 = scmp.eq.s32.totalorder %s25, 0
      %p45 = por %p43, %p44
      %p46 = scmp.ne.s32.totalorder %s35, %s38
      %p47 = scmp.eq.s32.totalorder %s30, 1
      %p48 = por %p46, %p47
      %p49 = scmp.ne.s32.totalorder %s38, %s39
      %p50 = scmp.eq.s32.totalorder %s30, 0
      %p51 = por %p49, %p50
      %p52 = scmp.ne.s32.totalorder %s38, %s39
      %p53 = scmp.eq.s32.totalorder %s31, 1
      %p54 = por %p52, %p53
      %p56 = scmp.ne.s32.totalorder %s39, %s55
      %p57 = scmp.eq.s32.totalorder %s31, 0
      %p58 = por %p56, %p57
      %s60 = sadd.s32 %s59, 1
      %p63 = scmp.eq.s32.totalorder %s25, 1
      %p64 = scmp.ne.s32.totalorder %s59, %s61
      %p65 = scmp.eq.s32.totalorder %s25, 0
      %p66 = por %p64, %p65
      %p67 = scmp.ne.s32.totalorder %s59, %s61
      %p68 = scmp.eq.s32.totalorder %s30, 1
      %p69 = por %p67, %p68
      %p70 = scmp.ne.s32.totalorder %s61, %s62
      %p71 = scmp.eq.s32.totalorder %s30, 0
      %p72 = por %p70, %p71
      %p73 = scmp.ne.s32.totalorder %s61, %s62
      %p74 = scmp.eq.s32.totalorder %s31, 1
      %p75 = por %p73, %p74
      %p77 = scmp.ne.s32.totalorder %s62, %s76
      %p78 = scmp.eq.s32.totalorder %s31, 0
      %p79 = por %p77, %p78
      %s81 = sadd.s32 %s80, 1
      %p84 = scmp.eq.s32.totalorder %s25, 1
      %p85 = scmp.ne.s32.totalorder %s80, %s82
      %p86 = scmp.eq.s32.totalorder %s25, 0
      %p87 = por %p85, %p86
      %p88 = scmp.ne.s32.totalorder %s80, %s82
      %p89 = scmp.eq.s32.totalorder %s30, 1
      %p90 = por %p88, %p89
      %p91 = scmp.ne.s32.totalorder %s82, %s83
      %p92 = scmp.eq.s32.totalorder %s30, 0
      %p93 = por %p91, %p92
      %p94 = scmp.ne.s32.totalorder %s82, %s83
      %p95 = scmp.eq.s32.totalorder %s31, 1
      %p96 = por %p94, %p95
      %p98 = scmp.ne.s32.totalorder %s83, %s97
      %p99 = scmp.eq.s32.totalorder %s31, 0
      %p100 = por %p98, %p99
      %s102 = sadd.s32 %s101, 1
      %p105 = scmp.eq.s32.totalorder %s25, 1
      %p106 = scmp.ne.s32.totalorder %s101, %s103
      %p107 = scmp.eq.s32.totalorder %s25, 0
      %p108 = por %p106, %p107
      %p109 = scmp.ne.s32.totalorder %s101, %s103
      %p110 = scmp.eq.s32.totalorder %s30, 1
      %p111 = por %p109, %p110
      %p112 = scmp.ne.s32.totalorder %s103, %s104
      %p113 = scmp.eq.s32.totalorder %s30, 0
      %p114 = por %p112, %p113
      %p115 = scmp.ne.s32.totalorder %s103, %s104
      %p116 = scmp.eq.s32.totalorder %s31, 1
      %p117 = por %p115, %p116
      %p119 = scmp.ne.s32.totalorder %s104, %s118
      %p120 = scmp.eq.s32.totalorder %s31, 0
      %p121 = por %p119, %p120
      %s123 = sadd.s32 %s122, 1
      %p126 = scmp.eq.s32.totalorder %s25, 1
      %p127 = scmp.ne.s32.totalorder %s122, %s124
      %p128 = scmp.eq.s32.totalorder %s25, 0
      %p129 = por %p127, %p128
      %p130 = scmp.ne.s32.totalorder %s122, %s124
      %p131 = scmp.eq.s32.totalorder %s30, 1
      %p132 = por %p130, %p131
      %p133 = scmp.ne.s32.totalorder %s124, %s125
      %p134 = scmp.eq.s32.totalorder %s30, 0
      %p135 = por %p133, %p134
      %p136 = scmp.ne.s32.totalorder %s124, %s125
      %p137 = scmp.eq.s32.totalorder %s31, 1
      %p138 = por %p136, %p137
      %p140 = scmp.ne.s32.totalorder %s125, %s139
      %p141 = scmp.eq.s32.totalorder %s31, 0
      %p142 = por %p140, %p141
      %s144 = sadd.s32 %s143, 1
      %p147 = scmp.eq.s32.totalorder %s25, 1
      %p148 = scmp.ne.s32.totalorder %s143, %s145
      %p149 = scmp.eq.s32.totalorder %s25, 0
      %p150 = por %p148, %p149
      %p151 = scmp.ne.s32.totalorder %s143, %s145
      %p152 = scmp.eq.s32.totalorder %s30, 1
      %p153 = por %p151, %p152
      %p154 = scmp.ne.s32.totalorder %s145, %s146
      %p155 = scmp.eq.s32.totalorder %s30, 0
      %p156 = por %p154, %p155
      %p157 = scmp.ne.s32.totalorder %s145, %s146
      %p158 = scmp.eq.s32.totalorder %s31, 1
      %p159 = por %p157, %p158
      %p161 = scmp.ne.s32.totalorder %s146, %s160
      %p162 = scmp.eq.s32.totalorder %s31, 0
      %p163 = por %p161, %p162
      %s165 = sadd.s32 %s164, 1
      %p168 = scmp.eq.s32.totalorder %s25, 1
      %p169 = scmp.ne.s32.totalorder %s164, %s166
      %p170 = scmp.eq.s32.totalorder %s25, 0
      %p171 = por %p169, %p170
      %p172 = scmp.ne.s32.totalorder %s164, %s166
      %p173 = scmp.eq.s32.totalorder %s30, 1
      %p174 = por %p172, %p173
      %p175 = scmp.ne.s32.totalorder %s166, %s167
      %p176 = scmp.eq.s32.totalorder %s30, 0
      %p177 = por %p175, %p176
      %p178 = scmp.ne.s32.totalorder %s166, %s167
      %p179 = scmp.eq.s32.totalorder %s31, 1
      %p180 = por %p178, %p179
      %p182 = scmp.ne.s32.totalorder %s167, %s181
      %p183 = scmp.eq.s32.totalorder %s31, 0
      %p184 = por %p182, %p183
      %s185 = ssub.s32 %s25, %s32
      %p186 = scmp.eq.s32.totalorder %s185, 0
      %s188 = sadd.s32 %s187, 1
      %s189 = scalar_select %p186, %s187, %s188
      %p192 = pneg %p186
      %p193 = scmp.eq.s32.totalorder %s25, 1
      %p194 = por %p192, %p193
      %p195 = scmp.ne.s32.totalorder %s187, %s190
      %p196 = scmp.eq.s32.totalorder %s25, 0
      %p197 = por %p195, %p196
      %p198 = scmp.ne.s32.totalorder %s187, %s190
      %p199 = scmp.eq.s32.totalorder %s30, 1
      %p200 = por %p198, %p199
      %p201 = scmp.ne.s32.totalorder %s190, %s191
      %p202 = scmp.eq.s32.totalorder %s30, 0
      %p203 = por %p201, %p202
      %p204 = scmp.ne.s32.totalorder %s190, %s191
      %p205 = scmp.eq.s32.totalorder %s31, 1
      %p206 = por %p204, %p205
      %p208 = scmp.ne.s32.totalorder %s191, %s207
      %p209 = scmp.eq.s32.totalorder %s31, 0
      %p210 = por %p208, %p209
      %s211 = ssub.s32 %s25, %s32
      %p212 = scmp.eq.s32.totalorder %s211, 0
      %s214 = sadd.s32 %s213, 1
      %s215 = scalar_select %p212, %s213, %s214
      %p218 = pneg %p212
      %p219 = scmp.eq.s32.totalorder %s25, 1
      %p220 = por %p218, %p219
      %p221 = scmp.ne.s32.totalorder %s213, %s216
      %p222 = scmp.eq.s32.totalorder %s25, 0
      %p223 = por %p221, %p222
      %p224 = scmp.ne.s32.totalorder %s213, %s216
      %p225 = scmp.eq.s32.totalorder %s30, 1
      %p226 = por %p224, %p225
      %p227 = scmp.ne.s32.totalorder %s216, %s217
      %p228 = scmp.eq.s32.totalorder %s30, 0
      %p229 = por %p227, %p228
      %p230 = scmp.ne.s32.totalorder %s216, %s217
      %p231 = scmp.eq.s32.totalorder %s31, 1
      %p232 = por %p230, %p231
      %p234 = scmp.ne.s32.totalorder %s217, %s233
      %p235 = scmp.eq.s32.totalorder %s31, 0
      %p236 = por %p234, %p235
      %p237 = scmp.le.s32.totalorder 1, %s25
      %p238 = scmp.lt.s32.totalorder %s25, 3
      %p239 = pnand %p237, %p238
      %p240 = pneg %p239
      // Predicated region
      $region9: #{tpu_custom_call.1} parent=5 // pred_check
        _
      $region10: #{tpu_custom_call.1} parent=5 // pred_check_branch
        %242 = sbr.rel (%p239) target = $region12
      $region11: #{tpu_custom_call.1} parent=5 // pred_region
        %s243 = ssub.s32 %s25, 1
        // Predicated region
        $region13: #{tpu_custom_call.1} parent=11 // pred_check
          %p244 = pneg %p72
        $region14: #{tpu_custom_call.1} parent=11 // pred_check_branch
          %246 = sbr.rel (%p244) target = $region16
        $region15: #{tpu_custom_call.1} parent=11 // pred_region
          %s248 = ssub.s32 2048, 2048
          %249 = vsyncadd [#allocation6], %s248
          %s250 = sshll.u32 [#allocation5], 4
          %s251 = int_to_ptr.vmem [resolvable:$true] %s250
          %256 = dma.hbm_to_vmem [thread:$0]  %s1, 2048, %s251, [#allocation6], 64, 64, 4
        $region16: #{tpu_custom_call.1} parent=11 // pred_fallthru
          _
        // Predicated region
        $region17: #{tpu_custom_call.1} parent=11 // pred_check
          %p257 = pneg %p93
        $region18: #{tpu_custom_call.1} parent=11 // pred_check_branch
          %259 = sbr.rel (%p257) target = $region20
        $region19: #{tpu_custom_call.1} parent=11 // pred_region
          _
        $region20: #{tpu_custom_call.1} parent=11 // pred_fallthru
          _
        // Predicated region
        $region21: #{tpu_custom_call.1} parent=11 // pred_check
          %p260 = pneg %p114
        $region22: #{tpu_custom_call.1} parent=11 // pred_check_branch
          %262 = sbr.rel (%p260) target = $region24
        $region23: #{tpu_custom_call.1} parent=11 // pred_region
          _
        $region24: #{tpu_custom_call.1} parent=11 // pred_fallthru
          _
        // Predicated region
        $region25: #{tpu_custom_call.1} parent=11 // pred_check
          %p263 = pneg %p135
        $region26: #{tpu_custom_call.1} parent=11 // pred_check_branch
          %265 = sbr.rel (%p263) target = $region28
        $region27: #{tpu_custom_call.1} parent=11 // pred_region
          _
        $region28: #{tpu_custom_call.1} parent=11 // pred_fallthru
          _
        // Predicated region
        $region29: #{tpu_custom_call.1} parent=11 // pred_check
          %p266 = pneg %p156
        $region30: #{tpu_custom_call.1} parent=11 // pred_check_branch
          %268 = sbr.rel (%p266) target = $region32
        $region31: #{tpu_custom_call.1} parent=11 // pred_region
          %s270 = ssub.s32 1024, 1024
          %271 = vsyncadd [#allocation6], %s270
          %s272 = sshll.u32 [#allocation7], 4
          %s273 = int_to_ptr.vmem [resolvable:$true] %s272
          %278 = dma.hbm_to_vmem [thread:$0]  %s5, 1024, %s273, [#allocation6], 64, 64, 4
        $region32: #{tpu_custom_call.1} parent=11 // pred_fallthru
          _
        // Predicated region
        $region33: #{tpu_custom_call.1} parent=11 // pred_check
          %p279 = pneg %p177
        $region34: #{tpu_custom_call.1} parent=11 // pred_check_branch
          %281 = sbr.rel (%p279) target = $region36
        $region35: #{tpu_custom_call.1} parent=11 // pred_region
          _
        $region36: #{tpu_custom_call.1} parent=11 // pred_fallthru
          _
      $region12: #{tpu_custom_call.1} parent=5 // pred_fallthru
        _
      %p282 = scmp.lt.s32.totalorder %s25, 2
      // Predicated region
      $region37: #{tpu_custom_call.1} parent=5 // pred_check
        %p283 = pneg %p282
      $region38: #{tpu_custom_call.1} parent=5 // pred_check_branch
        %285 = sbr.rel (%p283) target = $region40
      $region39: #{tpu_custom_call.1} parent=5 // pred_region
        // Predicated region
        $region41: #{tpu_custom_call.1} parent=39 // pred_check
          %p286 = pneg %p45
        $region42: #{tpu_custom_call.1} parent=39 // pred_check_branch
          %288 = sbr.rel (%p286) target = $region44
        $region43: #{tpu_custom_call.1} parent=39 // pred_region
          %s289 = sand.u32 %s35, 1
          %s290 = scalar_lea.sflag [#allocation3], %s289
          %s291 = sand.u32 %s35, 1
          %s292 = smul.addr %s291, 32
          %s293 = scalar_lea.vmem [#allocation2], %s292
          %s294 = smul.u32 4, %s25
          %s296 = ssub.s32 512, 512
          %297 = vsyncadd %s290, %s296
          %s298 = smul.addr %s294, 2
          %s299 = smul.addr %s298, 64
          %s300 = scalar_lea.hbm %s0, %s299
          %s301 = sshll.u32 %s293, 4
          %s302 = int_to_ptr.vmem [resolvable:$true] %s301
          %307 = dma.hbm_to_vmem [thread:$0]  %s300, 512, %s302, %s290, 128, 128, 8
        $region44: #{tpu_custom_call.1} parent=39 // pred_fallthru
          _
      $region40: #{tpu_custom_call.1} parent=5 // pred_fallthru
        _
      %p308 = scmp.le.s32.totalorder 1, %s25
      %p309 = scmp.lt.s32.totalorder %s25, 3
      %p310 = pnand %p308, %p309
      %p311 = pneg %p310
      // Predicated region
      $region45: #{tpu_custom_call.1} parent=5 // pred_check
        _
      $region46: #{tpu_custom_call.1} parent=5 // pred_check_branch
        %313 = sbr.rel (%p310) target = $region48
      $region47: #{tpu_custom_call.1} parent=5 // pred_region
        %s314 = ssub.s32 %s25, 1
        %s315 = sand.u32 %s38, 1
        %s316 = scalar_lea.sflag [#allocation3], %s315
        %s317 = sand.u32 %s38, 1
        %s318 = smul.addr %s317, 32
        %s319 = scalar_lea.vmem [#allocation2], %s318
        // Predicated region
        $region49: #{tpu_custom_call.1} parent=47 // pred_check
          %p320 = pneg %p51
        $region50: #{tpu_custom_call.1} parent=47 // pred_check_branch
          %322 = sbr.rel (%p320) target = $region52
        $region51: #{tpu_custom_call.1} parent=47 // pred_region
          %323 = dma.done %s316, 512
        $region52: #{tpu_custom_call.1} parent=47 // pred_fallthru
          _
        // Predicated region
        $region53: #{tpu_custom_call.1} parent=47 // pred_check
          %p324 = pneg %p72
        $region54: #{tpu_custom_call.1} parent=47 // pred_check_branch
          %326 = sbr.rel (%p324) target = $region56
        $region55: #{tpu_custom_call.1} parent=47 // pred_region
          %327 = dma.done [#allocation6], 2048
        $region56: #{tpu_custom_call.1} parent=47 // pred_fallthru
          _
        // Predicated region
        $region57: #{tpu_custom_call.1} parent=47 // pred_check
          %p328 = pneg %p156
        $region58: #{tpu_custom_call.1} parent=47 // pred_check_branch
          %330 = sbr.rel (%p328) target = $region60
        $region59: #{tpu_custom_call.1} parent=47 // pred_region
          %331 = dma.done [#allocation6], 1024
        $region60: #{tpu_custom_call.1} parent=47 // pred_fallthru
          _
        %s332 = sand.u32 %s38, 1
        %s333 = scalar_lea.sflag [#allocation3], %s332
        %s334 = sand.u32 %s38, 1
        %s335 = smul.addr %s334, 32
        %s336 = scalar_lea.vmem [#allocation2], %s335
        %p337 = pneg %p51
        %p338 = pneg %p48
        %p339 = pneg %p72
        %p340 = pneg %p69
        %p341 = pneg %p93
        %p342 = pneg %p90
        %p343 = pneg %p114
        %p344 = pneg %p111
        %p345 = pneg %p135
        %p346 = pneg %p132
        %p347 = pneg %p156
        %p348 = pneg %p153
        %p349 = pneg %p177
        %p350 = pneg %p174
        %p351 = pneg %p203
        %p352 = pneg %p200
        %s353 = sand.u32 %s190, 1
        %s354 = scalar_lea.sflag [#allocation4], %s353
        %s355 = sand.u32 %s190, 1
        %s356 = smul.addr %s355, 16
        %s357 = scalar_lea.vmem [#allocation8], %s356
        %p358 = pneg %p229
        %p359 = pneg %p226
        %s360 = sand.u32 %s216, 1
        %s361 = scalar_lea.sflag [#allocation10], %s360
        %s362 = sand.u32 %s216, 1
        %s363 = smul.addr %s362, 32
        %s364 = scalar_lea.vmem [#allocation9], %s363
        %s365 = smul.u32 4, %s30
        %s366 = smul.u32 4, %s30
        %s367 = smul.u32 4, %s30
        %v369 = vld [vmem:[%s319] sm:$0xff]
        %v370 = vld [vmem:[%s319 + $0x8] sm:$0xff]
        %v371 = vld [vmem:[%s319 + $0x10] sm:$0xff]
        %v372 = vld [vmem:[%s319 + $0x18] sm:$0xff]
        %v373 = vunpack.c.l.bf16 %v369
        %v374 = vunpack.c.h.bf16 %v369
        %v375 = vunpack.c.l.bf16 %v370
        %v376 = vunpack.c.h.bf16 %v370
        %v377 = vunpack.c.l.bf16 %v371
        %v378 = vunpack.c.h.bf16 %v371
        %v379 = vunpack.c.l.bf16 %v372
        %v380 = vunpack.c.h.bf16 %v372
        %v381 = vadd.f32 %v373, 1.0
        %v382 = vlog2.pop %v381
        %v383 = vmul.f32 %v382, 0.6931472
        %v384 = vmul.f32 -0.5, %v373
        %v385 = vadd.f32 %v384, 1.0
        %v386 = vmul.f32 %v385, %v373
        %v387 = vand.u32 2147483647, %v373
        %vm388 = vcmp.lt.f32.partialorder %v387, 0.0004427343
        %v389 = vsel %vm388, %v386, %v383
        %v390 = vadd.f32 %v374, 1.0
        %v391 = vlog2.pop %v390
        %v392 = vmul.f32 %v391, 0.6931472
        %v393 = vmul.f32 -0.5, %v374
        %v394 = vadd.f32 %v393, 1.0
        %v395 = vmul.f32 %v394, %v374
        %v396 = vand.u32 2147483647, %v374
        %vm397 = vcmp.lt.f32.partialorder %v396, 0.0004427343
        %v398 = vsel %vm397, %v395, %v392
        %v399 = vadd.f32 %v375, 1.0
        %v400 = vlog2.pop %v399
        %v401 = vmul.f32 %v400, 0.6931472
        %v402 = vmul.f32 -0.5, %v375
        %v403 = vadd.f32 %v402, 1.0
        %v404 = vmul.f32 %v403, %v375
        %v405 = vand.u32 2147483647, %v375
        %vm406 = vcmp.lt.f32.partialorder %v405, 0.0004427343
        %v407 = vsel %vm406, %v404, %v401
        %v408 = vadd.f32 %v376, 1.0
        %v409 = vlog2.pop %v408
        %v410 = vmul.f32 %v409, 0.6931472
        %v411 = vmul.f32 -0.5, %v376
        %v412 = vadd.f32 %v411, 1.0
        %v413 = vmul.f32 %v412, %v376
        %v414 = vand.u32 2147483647, %v376
        %vm415 = vcmp.lt.f32.partialorder %v414, 0.0004427343
        %v416 = vsel %vm415, %v413, %v410
        %v417 = vadd.f32 %v377, 1.0
        %v418 = vlog2.pop %v417
        %v419 = vmul.f32 %v418, 0.6931472
        %v420 = vmul.f32 -0.5, %v377
        %v421 = vadd.f32 %v420, 1.0
        %v422 = vmul.f32 %v421, %v377
        %v423 = vand.u32 2147483647, %v377
        %vm424 = vcmp.lt.f32.partialorder %v423, 0.0004427343
        %v425 = vsel %vm424, %v422, %v419
        %v426 = vadd.f32 %v378, 1.0
        %v427 = vlog2.pop %v426
        %v428 = vmul.f32 %v427, 0.6931472
        %v429 = vmul.f32 -0.5, %v378
        %v430 = vadd.f32 %v429, 1.0
        %v431 = vmul.f32 %v430, %v378
        %v432 = vand.u32 2147483647, %v378
        %vm433 = vcmp.lt.f32.partialorder %v432, 0.0004427343
        %v434 = vsel %vm433, %v431, %v428
        %v435 = vadd.f32 %v379, 1.0
        %v436 = vlog2.pop %v435
        %v437 = vmul.f32 %v436, 0.6931472
        %v438 = vmul.f32 -0.5, %v379
        %v439 = vadd.f32 %v438, 1.0
        %v440 = vmul.f32 %v439, %v379
        %v441 = vand.u32 2147483647, %v379
        %vm442 = vcmp.lt.f32.partialorder %v441, 0.0004427343
        %v443 = vsel %vm442, %v440, %v437
        %v444 = vadd.f32 %v380, 1.0
        %v445 = vlog2.pop %v444
        %v446 = vmul.f32 %v445, 0.6931472
        %v447 = vmul.f32 -0.5, %v380
        %v448 = vadd.f32 %v447, 1.0
        %v449 = vmul.f32 %v448, %v380
        %v450 = vand.u32 2147483647, %v380
        %vm451 = vcmp.lt.f32.partialorder %v450, 0.0004427343
        %v452 = vsel %vm451, %v449, %v446
        %v453 = vpack.c.bf16 %v407, %v389
        %v454 = vpack.c.bf16 %v416, %v398
        %v455 = vpack.c.bf16 %v443, %v425
        %v456 = vpack.c.bf16 %v452, %v434
        %v457 = vld [vmem:[#allocation5] sm:$0xf]
        %v458 = vld [vmem:[#allocation5 + $0x4] sm:$0xf]
        %v459 = vld [vmem:[#allocation5 + $0x8] sm:$0xf]
        %v460 = vld [vmem:[#allocation5 + $0xc] sm:$0xf]
        %v461 = vld [vmem:[#allocation5 + $0x10] sm:$0xf]
        %v462 = vld [vmem:[#allocation5 + $0x14] sm:$0xf]
        %v463 = vld [vmem:[#allocation5 + $0x18] sm:$0xf]
        %v464 = vld [vmem:[#allocation5 + $0x1c] sm:$0xf]
        %v465 = vld [vmem:[#allocation5 + $0x20] sm:$0xf]
        %v466 = vld [vmem:[#allocation5 + $0x24] sm:$0xf]
        %v467 = vld [vmem:[#allocation5 + $0x28] sm:$0xf]
        %v468 = vld [vmem:[#allocation5 + $0x2c] sm:$0xf]
        %v469 = vld [vmem:[#allocation5 + $0x30] sm:$0xf]
        %v470 = vld [vmem:[#allocation5 + $0x34] sm:$0xf]
        %v471 = vld [vmem:[#allocation5 + $0x38] sm:$0xf]
        %v472 = vld [vmem:[#allocation5 + $0x3c] sm:$0xf]
        %v473 = vld [vmem:[#allocation5 + $0x40] sm:$0xf]
        %v474 = vld [vmem:[#allocation5 + $0x44] sm:$0xf]
        %v475 = vld [vmem:[#allocation5 + $0x48] sm:$0xf]
        %v476 = vld [vmem:[#allocation5 + $0x4c] sm:$0xf]
        %v477 = vld [vmem:[#allocation5 + $0x50] sm:$0xf]
        %v478 = vld [vmem:[#allocation5 + $0x54] sm:$0xf]
        %v479 = vld [vmem:[#allocation5 + $0x58] sm:$0xf]
        %v480 = vld [vmem:[#allocation5 + $0x5c] sm:$0xf]
        %v481 = vld [vmem:[#allocation5 + $0x60] sm:$0xf]
        %v482 = vld [vmem:[#allocation5 + $0x64] sm:$0xf]
        %v483 = vld [vmem:[#allocation5 + $0x68] sm:$0xf]
        %v484 = vld [vmem:[#allocation5 + $0x6c] sm:$0xf]
        %v485 = vld [vmem:[#allocation5 + $0x70] sm:$0xf]
        %v486 = vld [vmem:[#allocation5 + $0x74] sm:$0xf]
        %v487 = vld [vmem:[#allocation5 + $0x78] sm:$0xf]
        %v488 = vld [vmem:[#allocation5 + $0x7c] sm:$0xf]
        %v489 = vld [vmem:[%s2] sm:$0x1]
        %v491 = vlaneseq
        %v492 = vshrl.u32 %v491, 7
        %v493 = vsub.s32 0, %v492
        %v494 = vrot.slane %v489, %v493
        %v528 = vunpack.c.l.b16 %v457
        %v529 = vunpack.c.l.b16 %v458
        %v530 = vunpack.c.l.b16 %v459
        %v531 = vunpack.c.l.b16 %v460
        %v532 = vunpack.c.l.b16 %v461
        %v533 = vunpack.c.l.b16 %v462
        %v534 = vunpack.c.l.b16 %v463
        %v535 = vunpack.c.l.b16 %v464
        %v536 = vunpack.c.l.b16 %v465
        %v537 = vunpack.c.l.b16 %v466
        %v538 = vunpack.c.l.b16 %v467
        %v539 = vunpack.c.l.b16 %v468
        %v540 = vunpack.c.l.b16 %v469
        %v541 = vunpack.c.l.b16 %v470
        %v542 = vunpack.c.l.b16 %v471
        %v543 = vunpack.c.l.b16 %v472
        %v544 = vunpack.c.l.b16 %v473
        %v545 = vunpack.c.l.b16 %v474
        %v546 = vunpack.c.l.b16 %v475
        %v547 = vunpack.c.l.b16 %v476
        %v548 = vunpack.c.l.b16 %v477
        %v549 = vunpack.c.l.b16 %v478
        %v550 = vunpack.c.l.b16 %v479
        %v551 = vunpack.c.l.b16 %v480
        %v552 = vunpack.c.l.b16 %v481
        %v553 = vunpack.c.l.b16 %v482
        %v554 = vunpack.c.l.b16 %v483
        %v555 = vunpack.c.l.b16 %v484
        %v556 = vunpack.c.l.b16 %v485
        %v557 = vunpack.c.l.b16 %v486
        %v558 = vunpack.c.l.b16 %v487
        %v559 = vunpack.c.l.b16 %v488
        %v560 = vpack.c.b16 %v529, %v528
        %v561 = vpack.c.b16 %v531, %v530
        %v562 = vpack.c.b16 %v533, %v532
        %v563 = vpack.c.b16 %v535, %v534
        %v564 = vpack.c.b16 %v537, %v536
        %v565 = vpack.c.b16 %v539, %v538
        %v566 = vpack.c.b16 %v541, %v540
        %v567 = vpack.c.b16 %v543, %v542
        %v568 = vpack.c.b16 %v545, %v544
        %v569 = vpack.c.b16 %v547, %v546
        %v570 = vpack.c.b16 %v549, %v548
        %v571 = vpack.c.b16 %v551, %v550
        %v572 = vpack.c.b16 %v553, %v552
        %v573 = vpack.c.b16 %v555, %v554
        %v574 = vpack.c.b16 %v557, %v556
        %v575 = vpack.c.b16 %v559, %v558
        %592 = vmatprep.subr.bf16.mxu0 0
        %593 = vmatpush1.bf16.msra.mxu0 %v560
        %594 = vmatprep.subr.bf16.mxu0 0
        %595 = vmatpush1.bf16.msra.mxu0 %v561
        %596 = vmatprep.subr.bf16.mxu0 0
        %597 = vmatpush1.bf16.msra.mxu0 %v562
        %598 = vmatprep.subr.bf16.mxu0 0
        %599 = vmatpush1.bf16.msra.mxu0 %v563
        %600 = vmatprep.subr.bf16.mxu0 0
        %601 = vmatpush1.bf16.msra.mxu0 %v564
        %602 = vmatprep.subr.bf16.mxu0 0
        %603 = vmatpush1.bf16.msra.mxu0 %v565
        %604 = vmatprep.subr.bf16.mxu0 0
        %605 = vmatpush1.bf16.msra.mxu0 %v566
        %606 = vmatprep.subr.bf16.mxu0 0
        %607 = vmatpush1.bf16.msra.mxu0 %v567
        %608 = vmatprep.subr.bf16.mxu0 0
        %609 = vmatpush1.bf16.msra.mxu0 %v568
        %610 = vmatprep.subr.bf16.mxu0 0
        %611 = vmatpush1.bf16.msra.mxu0 %v569
        %612 = vmatprep.subr.bf16.mxu0 0
        %613 = vmatpush1.bf16.msra.mxu0 %v570
        %614 = vmatprep.subr.bf16.mxu0 0
        %615 = vmatpush1.bf16.msra.mxu0 %v571
        %616 = vmatprep.subr.bf16.mxu0 0
        %617 = vmatpush1.bf16.msra.mxu0 %v572
        %618 = vmatprep.subr.bf16.mxu0 0
        %619 = vmatpush1.bf16.msra.mxu0 %v573
        %620 = vmatprep.subr.bf16.mxu0 0
        %621 = vmatpush1.bf16.msra.mxu0 %v574
        %622 = vmatprep.subr.bf16.mxu0 0
        %623 = vmatpush1.bf16.msra.mxu0 %v575
        %624 = vmatprep.mubr.bf16.mxu0 %v454
        %625 = vmatmul.mubr.bf16.gmra.mrb[0].mxu0 %v453
        %v626 = vpop.f32.mrb[0].mxu0
        %v627 = vadd.f32 %v494, %v626
        %v628 = vpop.f32.mrb[0].mxu0
        %v629 = vpop.f32.mrb[0].mxu0
        %v630 = vadd.f32 %v494, %v629
        %v631 = vpop.f32.mrb[0].mxu0
        %632 = vmatprep.mubr.bf16.mxu0 %v456
        %633 = vmatmul.mubr.bf16.gmra.mrb[0].mxu0 %v455
        %v634 = vpop.f32.mrb[0].mxu0
        %v635 = vadd.f32 %v494, %v634
        %v636 = vpop.f32.mrb[0].mxu0
        %v637 = vpop.f32.mrb[0].mxu0
        %v638 = vadd.f32 %v494, %v637
        %v639 = vpop.f32.mrb[0].mxu0
        %640 = vdwg.mxu0
        %641 = vadd.xlane.f32.xlu0 %v627
        %v642 = vpop.xlane.xlu0 %641
        %643 = vadd.xlane.f32.xlu0 %v630
        %v644 = vpop.xlane.xlu0 %643
        %645 = vadd.xlane.f32.xlu0 %v635
        %v646 = vpop.xlane.xlu0 %645
        %647 = vadd.xlane.f32.xlu0 %v638
        %v648 = vpop.xlane.xlu0 %647
        %v649 = vrcp.pop 128.0
        %v650 = vmul.f32 %v642, %v649
        %v651 = vmul.f32 %v644, %v649
        %v652 = vmul.f32 %v646, %v649
        %v653 = vmul.f32 %v648, %v649
        %v654 = vsub.f32 %v627, %v650
        %v655 = vsub.f32 %v630, %v651
        %v656 = vsub.f32 %v635, %v652
        %v657 = vsub.f32 %v638, %v653
        %v658 = vmul.f32 %v654, %v654
        %v659 = vmul.f32 %v655, %v655
        %v660 = vmul.f32 %v656, %v656
        %v661 = vmul.f32 %v657, %v657
        %662 = vadd.xlane.f32.xlu0 %v658
        %v663 = vpop.xlane.xlu0 %662
        %664 = vadd.xlane.f32.xlu0 %v659
        %v665 = vpop.xlane.xlu0 %664
        %666 = vadd.xlane.f32.xlu0 %v660
        %v667 = vpop.xlane.xlu0 %666
        %668 = vadd.xlane.f32.xlu0 %v661
        %v669 = vpop.xlane.xlu0 %668
        %v670 = vmul.f32 %v663, %v649
        %v671 = vmul.f32 %v665, %v649
        %v672 = vmul.f32 %v667, %v649
        %v673 = vmul.f32 %v669, %v649
        %v674 = vadd.f32 %v670, 1e-05
        %v675 = vadd.f32 %v671, 1e-05
        %v676 = vadd.f32 %v672, 1e-05
        %v677 = vadd.f32 %v673, 1e-05
        %v678 = vrsqrt.pop %v674
        %v679 = vrsqrt.pop %v675
        %v680 = vrsqrt.pop %v676
        %v681 = vrsqrt.pop %v677
        %v682 = vmul.f32 %v654, %v678
        %v683 = vmul.f32 %v655, %v679
        %v684 = vmul.f32 %v656, %v680
        %v685 = vmul.f32 %v657, %v681
        %v686 = vld [vmem:[%s3] sm:$0x1]
        %v688 = vlaneseq
        %v689 = vshrl.u32 %v688, 7
        %v690 = vsub.s32 0, %v689
        %v691 = vrot.slane %v686, %v690
        %v693 = vmul.f32 %v682, %v691
        %v694 = vmul.f32 %v683, %v691
        %v695 = vmul.f32 %v684, %v691
        %v696 = vmul.f32 %v685, %v691
        %v697 = vld [vmem:[%s4] sm:$0x1]
        %v699 = vlaneseq
        %v700 = vshrl.u32 %v699, 7
        %v701 = vsub.s32 0, %v700
        %v702 = vrot.slane %v697, %v701
        %v704 = vadd.f32 %v693, %v702
        %v705 = vadd.f32 %v694, %v702
        %v706 = vadd.f32 %v695, %v702
        %v707 = vadd.f32 %v696, %v702
        %v708 = vmax.f32 %v704, 0.0
        %v709 = vmax.f32 %v705, 0.0
        %v710 = vmax.f32 %v706, 0.0
        %v711 = vmax.f32 %v707, 0.0
        %v712 = vpack.c.bf16 %v709, %v708
        %v713 = vpack.c.bf16 %v711, %v710
        %v716 = vunpack.c.l.b16 %v712
        %v717 = vunpack.c.h.b16 %v712
        %v718 = vunpack.c.l.b16 %v713
        %v719 = vunpack.c.h.b16 %v713
        %v720 = vpack.c.b16 %v716, %v716
        %v721 = vpack.c.b16 %v717, %v717
        %v722 = vpack.c.b16 %v718, %v718
        %v723 = vpack.c.b16 %v719, %v719
        %728 = vst [vmem:[%s357] sm:$0xf] %v720
        %729 = vst [vmem:[%s357 + $0x4] sm:$0xf] %v721
        %730 = vst [vmem:[%s357 + $0x8] sm:$0xf] %v722
        %731 = vst [vmem:[%s357 + $0xc] sm:$0xf] %v723
        %v732 = vld [vmem:[#allocation7] sm:$0xf]
        %v733 = vld [vmem:[#allocation7 + $0x4] sm:$0xf]
        %v734 = vld [vmem:[#allocation7 + $0x8] sm:$0xf]
        %v735 = vld [vmem:[#allocation7 + $0xc] sm:$0xf]
        %v736 = vld [vmem:[#allocation7 + $0x10] sm:$0xf]
        %v737 = vld [vmem:[#allocation7 + $0x14] sm:$0xf]
        %v738 = vld [vmem:[#allocation7 + $0x18] sm:$0xf]
        %v739 = vld [vmem:[#allocation7 + $0x1c] sm:$0xf]
        %v740 = vld [vmem:[#allocation7 + $0x20] sm:$0xf]
        %v741 = vld [vmem:[#allocation7 + $0x24] sm:$0xf]
        %v742 = vld [vmem:[#allocation7 + $0x28] sm:$0xf]
        %v743 = vld [vmem:[#allocation7 + $0x2c] sm:$0xf]
        %v744 = vld [vmem:[#allocation7 + $0x30] sm:$0xf]
        %v745 = vld [vmem:[#allocation7 + $0x34] sm:$0xf]
        %v746 = vld [vmem:[#allocation7 + $0x38] sm:$0xf]
        %v747 = vld [vmem:[#allocation7 + $0x3c] sm:$0xf]
        %v748 = vld [vmem:[%s6] sm:$0x1]
        %v750 = vlaneseq
        %v751 = vshrl.u32 %v750, 7
        %v752 = vsub.s32 0, %v751
        %v753 = vrot.slane %v748, %v752
        %v771 = vunpack.c.l.b16 %v732
        %v772 = vunpack.c.l.b16 %v733
        %v773 = vunpack.c.l.b16 %v734
        %v774 = vunpack.c.l.b16 %v735
        %v775 = vunpack.c.l.b16 %v736
        %v776 = vunpack.c.l.b16 %v737
        %v777 = vunpack.c.l.b16 %v738
        %v778 = vunpack.c.l.b16 %v739
        %v779 = vunpack.c.l.b16 %v740
        %v780 = vunpack.c.l.b16 %v741
        %v781 = vunpack.c.l.b16 %v742
        %v782 = vunpack.c.l.b16 %v743
        %v783 = vunpack.c.l.b16 %v744
        %v784 = vunpack.c.l.b16 %v745
        %v785 = vunpack.c.l.b16 %v746
        %v786 = vunpack.c.l.b16 %v747
        %v787 = vpack.c.b16 %v772, %v771
        %v788 = vpack.c.b16 %v774, %v773
        %v789 = vpack.c.b16 %v776, %v775
        %v790 = vpack.c.b16 %v778, %v777
        %v791 = vpack.c.b16 %v780, %v779
        %v792 = vpack.c.b16 %v782, %v781
        %v793 = vpack.c.b16 %v784, %v783
        %v794 = vpack.c.b16 %v786, %v785
        %803 = vmatprep.subr.bf16.mxu0 0
        %804 = vmatpush1.bf16.msra.mxu0 %v787
        %805 = vmatprep.subr.bf16.mxu0 0
        %806 = vmatpush1.bf16.msra.mxu0 %v788
        %807 = vmatprep.subr.bf16.mxu0 0
        %808 = vmatpush1.bf16.msra.mxu0 %v789
        %809 = vmatprep.subr.bf16.mxu0 0
        %810 = vmatpush1.bf16.msra.mxu0 %v790
        %811 = vmatprep.subr.bf16.mxu0 0
        %812 = vmatpush1.bf16.msra.mxu0 %v791
        %813 = vmatprep.subr.bf16.mxu0 0
        %814 = vmatpush1.bf16.msra.mxu0 %v792
        %815 = vmatprep.subr.bf16.mxu0 0
        %816 = vmatpush1.bf16.msra.mxu0 %v793
        %817 = vmatprep.subr.bf16.mxu0 0
        %818 = vmatpush1.bf16.msra.mxu0 %v794
        %819 = vmatprep.subr.bf16.mxu0 0
        %820 = vmatpush1.bf16.msra.mxu0 0
        %821 = vmatprep.subr.bf16.mxu0 0
        %822 = vmatpush1.bf16.msra.mxu0 0
        %823 = vmatprep.subr.bf16.mxu0 0
        %824 = vmatpush1.bf16.msra.mxu0 0
        %825 = vmatprep.subr.bf16.mxu0 0
        %826 = vmatpush1.bf16.msra.mxu0 0
        %827 = vmatprep.subr.bf16.mxu0 0
        %828 = vmatpush1.bf16.msra.mxu0 0
        %829 = vmatprep.subr.bf16.mxu0 0
        %830 = vmatpush1.bf16.msra.mxu0 0
        %831 = vmatprep.subr.bf16.mxu0 0
        %832 = vmatpush1.bf16.msra.mxu0 0
        %833 = vmatprep.subr.bf16.mxu0 0
        %834 = vmatpush1.bf16.msra.mxu0 0
        %835 = vmatprep.mubr.bf16.mxu0 0
        %836 = vmatmul.mubr.bf16.gmra.mrb[0].mxu0 %v712
        %v837 = vpop.f32.mrb[0].mxu0
        %v838 = vadd.f32 %v753, %v837
        %v839 = vpop.f32.mrb[0].mxu0
        %v840 = vpop.f32.mrb[0].mxu0
        %v841 = vadd.f32 %v753, %v840
        %v842 = vpop.f32.mrb[0].mxu0
        %843 = vmatprep.mubr.bf16.mxu0 0
        %844 = vmatmul.mubr.bf16.gmra.mrb[0].mxu0 %v713
        %v845 = vpop.f32.mrb[0].mxu0
        %v846 = vadd.f32 %v753, %v845
        %v847 = vpop.f32.mrb[0].mxu0
        %v848 = vpop.f32.mrb[0].mxu0
        %v849 = vadd.f32 %v753, %v848
        %v850 = vpop.f32.mrb[0].mxu0
        %851 = vdwg.mxu0
        %852 = vst [vmem:[%s364] sm:$0xff] %v838
        %853 = vst [vmem:[%s364 + $0x8] sm:$0xff] %v841
        %854 = vst [vmem:[%s364 + $0x10] sm:$0xff] %v846
        %855 = vst [vmem:[%s364 + $0x18] sm:$0xff] %v849
        %s856 = sand.u32 %s190, 1
        %s857 = scalar_lea.sflag [#allocation4], %s856
        %s858 = sand.u32 %s190, 1
        %s859 = smul.addr %s858, 16
        %s860 = scalar_lea.vmem [#allocation8], %s859
        %s861 = sand.u32 %s216, 1
        %s862 = scalar_lea.sflag [#allocation10], %s861
        %s863 = sand.u32 %s216, 1
        %s864 = smul.addr %s863, 32
        %s865 = scalar_lea.vmem [#allocation9], %s864
        // Predicated region
        $region61: #{tpu_custom_call.1} parent=47 // pred_check
          %p866 = pneg %p200
        $region62: #{tpu_custom_call.1} parent=47 // pred_check_branch
          %868 = sbr.rel (%p866) target = $region64
        $region63: #{tpu_custom_call.1} parent=47 // pred_region
          %s869 = smul.u32 4, %s30
          %s871 = ssub.s32 256, 256
          %872 = vsyncadd %s857, %s871
          %s873 = smul.addr %s869, 64
          %s874 = scalar_lea.hbm %s7, %s873
          %s875 = sshll.u32 %s860, 4
          %s876 = int_to_ptr.vmem [resolvable:$true] %s875
          %881 = dma.vmem_to_hbm [thread:$0]  %s876, 256, %s874, %s857, 64, 64, 4
        $region64: #{tpu_custom_call.1} parent=47 // pred_fallthru
          _
        // Predicated region
        $region65: #{tpu_custom_call.1} parent=47 // pred_check
          %p882 = pneg %p226
        $region66: #{tpu_custom_call.1} parent=47 // pred_check_branch
          %884 = sbr.rel (%p882) target = $region68
        $region67: #{tpu_custom_call.1} parent=47 // pred_region
          %s885 = smul.u32 4, %s30
          %s887 = ssub.s32 512, 512
          %888 = vsyncadd %s862, %s887
          %s889 = smul.addr %s885, 128
          %s890 = scalar_lea.hbm %s8, %s889
          %s891 = sshll.u32 %s865, 4
          %s892 = int_to_ptr.vmem [resolvable:$true] %s891
          %897 = dma.vmem_to_hbm [thread:$0]  %s892, 512, %s890, %s862, 128, 128, 8
        $region68: #{tpu_custom_call.1} parent=47 // pred_fallthru
          _
      $region48: #{tpu_custom_call.1} parent=5 // pred_fallthru
        _
      %p898 = scmp.le.s32.totalorder 2, %s25
      // Predicated region
      $region69: #{tpu_custom_call.1} parent=5 // pred_check
        %p899 = pneg %p898
      $region70: #{tpu_custom_call.1} parent=5 // pred_check_branch
        %901 = sbr.rel (%p899) target = $region72
      $region71: #{tpu_custom_call.1} parent=5 // pred_region
        %s902 = ssub.s32 %s25, 2
        // Predicated region
        $region73: #{tpu_custom_call.1} parent=71 // pred_check
          %p903 = pneg %p206
        $region74: #{tpu_custom_call.1} parent=71 // pred_check_branch
          %905 = sbr.rel (%p903) target = $region76
        $region75: #{tpu_custom_call.1} parent=71 // pred_region
          %s906 = sand.u32 %s191, 1
          %s907 = scalar_lea.sflag [#allocation4], %s906
          %s908 = sand.u32 %s191, 1
          %s909 = smul.addr %s908, 16
          %s910 = scalar_lea.vmem [#allocation8], %s909
          %911 = dma.done %s907, 256
        $region76: #{tpu_custom_call.1} parent=71 // pred_fallthru
          _
        // Predicated region
        $region77: #{tpu_custom_call.1} parent=71 // pred_check
          %p912 = pneg %p232
        $region78: #{tpu_custom_call.1} parent=71 // pred_check_branch
          %914 = sbr.rel (%p912) target = $region80
        $region79: #{tpu_custom_call.1} parent=71 // pred_region
          %s915 = sand.u32 %s217, 1
          %s916 = scalar_lea.sflag [#allocation10], %s915
          %s917 = sand.u32 %s217, 1
          %s918 = smul.addr %s917, 32
          %s919 = scalar_lea.vmem [#allocation9], %s918
          %920 = dma.done %s916, 512
        $region80: #{tpu_custom_call.1} parent=71 // pred_fallthru
          _
      $region72: #{tpu_custom_call.1} parent=5 // pred_fallthru
        _
    $region6: #{tpu_custom_call.1} parent=1 // loop_footer
      %s29 = sadd.s32 1, %s25
    $region7: #{tpu_custom_call.1} parent=1 // loop_footer_branch
      %24 = sbr.rel target = $region3
    $region8: #{tpu_custom_call.1} parent=1 // loop_exit
      _
    %921 = vsyncpa [#allocation3], 1
    %s922 = scalar_lea.sflag [#allocation3], 1
    %923 = vsyncpa %s922, 1
    %924 = vsyncpa [#allocation6], 1
    %925 = vsyncpa [#allocation4], 1
    %s926 = scalar_lea.sflag [#allocation4], 1
    %927 = vsyncpa %s926, 1
    %928 = vsyncpa [#allocation10], 1
    %s929 = scalar_lea.sflag [#allocation10], 1
    %930 = vsyncpa %s929, 1

// kernel: tpu_custom_call.1
$region0: #{tpu_custom_call.1}
  #allocation0 [shape = 'u32[]', space=smem, size = 0x4, offset = 0x4, fixed_abs, tag = 'smem constant byte address 0x4 - core index']
  #allocation1 [shape = 'u32[144,128]{1,0:T(1,128)}', space=vmem, size = 0x12000, scoped, tag = 'internal scratch']
  %s0 = inlined_call_operand.hbm [shape: bf16[64,256], index: 0, kind: input, shape index: {}]
  %s1 = inlined_call_operand.hbm [shape: bf16[256,128], index: 1, kind: input, shape index: {}]
  %s2 = inlined_call_operand.vmem [shape: f32[1,128], index: 2, kind: input, shape index: {}]
  %s3 = inlined_call_operand.vmem [shape: f32[1,128], index: 3, kind: input, shape index: {}]
  %s4 = inlined_call_operand.vmem [shape: f32[1,128], index: 4, kind: input, shape index: {}]
  %s5 = inlined_call_operand.hbm [shape: bf16[128,128], index: 5, kind: input, shape index: {}]
  %s6 = inlined_call_operand.vmem [shape: f32[1,128], index: 6, kind: input, shape index: {}]
  %s7 = inlined_call_operand.hbm [shape: bf16[64,128], index: 7, kind: output, shape index: {0}]
  %s8 = inlined_call_operand.hbm [shape: f32[64,128], index: 8, kind: output, shape index: {1}]
  %9 = xla_tuple %s7, %s8
  %s10 = sld [smem:[#allocation0]]
  $region81: #{tpu_custom_call.1} parent=0
    _
  %s12 = ssub.s32 1, %s10
  %s13 = scalar_select 0, %s12, %s10
  $region1: #{tpu_custom_call.1} parent=0
    #allocation2 [shape = 'u8[32768]{0}', space=vmem, size = 0x8000, scoped, tag = 'input window, operand 0']
    #allocation3 [shape = 's32[2]{0}', space=sflag, size = 0x8, scoped, tag = 'scoped memory for tpu_custom_call.1']
    #allocation4 [shape = 's32[2]{0}', space=sflag, size = 0x8, scoped, tag = 'scoped memory for tpu_custom_call.1']
    #allocation5 [shape = 'u8[65536]{0}', space=vmem, size = 0x10000, scoped, tag = 'input window, operand 1, single buffered']
    #allocation6 [shape = 's32[1]{0}', space=sflag, size = 0x4, scoped, tag = 'scoped memory for tpu_custom_call.1']
    #allocation7 [shape = 'u8[32768]{0}', space=vmem, size = 0x8000, scoped, tag = 'input window, operand 5, single buffered']
    #allocation8 [shape = 'u8[16384]{0}', space=vmem, size = 0x4000, scoped, tag = 'output window, operand 0']
    #allocation9 [shape = 'u8[32768]{0}', space=vmem, size = 0x8000, scoped, tag = 'output window, operand 1']
    #allocation10 [shape = 's32[2]{0}', space=sflag, size = 0x8, scoped, tag = 'scoped memory for tpu_custom_call.1']
    %14 = vsyncpa [#allocation3], 0
    %s15 = scalar_lea.sflag [#allocation3], 1
    %16 = vsyncpa %s15, 0
    %17 = vsyncpa [#allocation6], 0
    %18 = vsyncpa [#allocation4], 0
    %s19 = scalar_lea.sflag [#allocation4], 1
    %20 = vsyncpa %s19, 0
    %21 = vsyncpa [#allocation10], 0
    %s22 = scalar_lea.sflag [#allocation10], 1
    %23 = vsyncpa %s22, 0
    loop: start=0, step=1, limit=4
    $region2: #{tpu_custom_call.1} parent=1 // loop_pre_header
      _
    $region3: #{tpu_custom_call.1} parent=1 // loop_header
      %s25 = sphi 0, %s29
      %p26 = scmp.ge.s32.totalorder %s25, 4
      %s35 = sphi 0, %s37
      %s38 = sphi 0, %s35
      %s39 = sphi 0, %s38
      %s55 = sphi 0, %s39
      %s59 = sphi 0, %s59
      %s61 = sphi 0, %s59
      %s62 = sphi 0, %s61
      %s76 = sphi 0, %s62
      %s80 = sphi 0, %s80
      %s82 = sphi 0, %s80
      %s83 = sphi 0, %s82
      %s97 = sphi 0, %s83
      %s101 = sphi 0, %s101
      %s103 = sphi 0, %s101
      %s104 = sphi 0, %s103
      %s118 = sphi 0, %s104
      %s122 = sphi 0, %s122
      %s124 = sphi 0, %s122
      %s125 = sphi 0, %s124
      %s139 = sphi 0, %s125
      %s143 = sphi 0, %s143
      %s145 = sphi 0, %s143
      %s146 = sphi 0, %s145
      %s160 = sphi 0, %s146
      %s164 = sphi 0, %s164
      %s166 = sphi 0, %s164
      %s167 = sphi 0, %s166
      %s181 = sphi 0, %s167
      %s187 = sphi 0, %s189
      %s190 = sphi 0, %s187
      %s191 = sphi 0, %s190
      %s207 = sphi 0, %s191
      %s213 = sphi 0, %s215
      %s216 = sphi 0, %s213
      %s217 = sphi 0, %s216
      %s233 = sphi 0, %s217
    $region4: #{tpu_custom_call.1} parent=1 // loop_header_branch
      %28 = sbr.rel (%p26) target = $region8
    $region5: #{tpu_custom_call.1} parent=1 // loop_body
      %s30 = ssub.s32 %s25, 1
      %s31 = ssub.s32 %s25, 2
      %s32 = sadd.s32 %s25, 1
      %s33 = ssub.s32 %s25, %s32
      %p34 = scmp.eq.s32.totalorder %s33, 0
      %s36 = sadd.s32 %s35, 1
      %s37 = scalar_select %p34, %s35, %s36
      %p40 = pneg %p34
      %p41 = scmp.eq.s32.totalorder %s25, 1
      %p42 = por %p40, %p41
      %p43 = scmp.ne.s32.totalorder %s35, %s38
      %p44 = scmp.eq.s32.totalorder %s25, 0
      %p45 = por %p43, %p44
      %p46 = scmp.ne.s32.totalorder %s35, %s38
      %p47 = scmp.eq.s32.totalorder %s30, 1
      %p48 = por %p46, %p47
      %p49 = scmp.ne.s32.totalorder %s38, %s39
      %p50 = scmp.eq.s32.totalorder %s30, 0
      %p51 = por %p49, %p50
      %p52 = scmp.ne.s32.totalorder %s38, %s39
      %p53 = scmp.eq.s32.totalorder %s31, 1
      %p54 = por %p52, %p53
      %p56 = scmp.ne.s32.totalorder %s39, %s55
      %p57 = scmp.eq.s32.totalorder %s31, 0
      %p58 = por %p56, %p57
      %s60 = sadd.s32 %s59, 1
      %p63 = scmp.eq.s32.totalorder %s25, 1
      %p64 = scmp.ne.s32.totalorder %s59, %s61
      %p65 = scmp.eq.s32.totalorder %s25, 0
      %p66 = por %p64, %p65
      %p67 = scmp.ne.s32.totalorder %s59, %s61
      %p68 = scmp.eq.s32.totalorder %s30, 1
      %p69 = por %p67, %p68
      %p70 = scmp.ne.s32.totalorder %s61, %s62
      %p71 = scmp.eq.s32.totalorder %s30, 0
      %p72 = por %p70, %p71
      %p73 = scmp.ne.s32.totalorder %s61, %s62
      %p74 = scmp.eq.s32.totalorder %s31, 1
      %p75 = por %p73, %p74
      %p77 = scmp.ne.s32.totalorder %s62, %s76
      %p78 = scmp.eq.s32.totalorder %s31, 0
      %p79 = por %p77, %p78
      %s81 = sadd.s32 %s80, 1
      %p84 = scmp.eq.s32.totalorder %s25, 1
      %p85 = scmp.ne.s32.totalorder %s80, %s82
      %p86 = scmp.eq.s32.totalorder %s25, 0
      %p87 = por %p85, %p86
      %p88 = scmp.ne.s32.totalorder %s80, %s82
      %p89 = scmp.eq.s32.totalorder %s30, 1
      %p90 = por %p88, %p89
      %p91 = scmp.ne.s32.totalorder %s82, %s83
      %p92 = scmp.eq.s32.totalorder %s30, 0
      %p93 = por %p91, %p92
      %p94 = scmp.ne.s32.totalorder %s82, %s83
      %p95 = scmp.eq.s32.totalorder %s31, 1
      %p96 = por %p94, %p95
      %p98 = scmp.ne.s32.totalorder %s83, %s97
      %p99 = scmp.eq.s32.totalorder %s31, 0
      %p100 = por %p98, %p99
      %s102 = sadd.s32 %s101, 1
      %p105 = scmp.eq.s32.totalorder %s25, 1
      %p106 = scmp.ne.s32.totalorder %s101, %s103
      %p107 = scmp.eq.s32.totalorder %s25, 0
      %p108 = por %p106, %p107
      %p109 = scmp.ne.s32.totalorder %s101, %s103
      %p110 = scmp.eq.s32.totalorder %s30, 1
      %p111 = por %p109, %p110
      %p112 = scmp.ne.s32.totalorder %s103, %s104
      %p113 = scmp.eq.s32.totalorder %s30, 0
      %p114 = por %p112, %p113
      %p115 = scmp.ne.s32.totalorder %s103, %s104
      %p116 = scmp.eq.s32.totalorder %s31, 1
      %p117 = por %p115, %p116
      %p119 = scmp.ne.s32.totalorder %s104, %s118
      %p120 = scmp.eq.s32.totalorder %s31, 0
      %p121 = por %p119, %p120
      %s123 = sadd.s32 %s122, 1
      %p126 = scmp.eq.s32.totalorder %s25, 1
      %p127 = scmp.ne.s32.totalorder %s122, %s124
      %p128 = scmp.eq.s32.totalorder %s25, 0
      %p129 = por %p127, %p128
      %p130 = scmp.ne.s32.totalorder %s122, %s124
      %p131 = scmp.eq.s32.totalorder %s30, 1
      %p132 = por %p130, %p131
      %p133 = scmp.ne.s32.totalorder %s124, %s125
      %p134 = scmp.eq.s32.totalorder %s30, 0
      %p135 = por %p133, %p134
      %p136 = scmp.ne.s32.totalorder %s124, %s125
      %p137 = scmp.eq.s32.totalorder %s31, 1
      %p138 = por %p136, %p137
      %p140 = scmp.ne.s32.totalorder %s125, %s139
      %p141 = scmp.eq.s32.totalorder %s31, 0
      %p142 = por %p140, %p141
      %s144 = sadd.s32 %s143, 1
      %p147 = scmp.eq.s32.totalorder %s25, 1
      %p148 = scmp.ne.s32.totalorder %s143, %s145
      %p149 = scmp.eq.s32.totalorder %s25, 0
      %p150 = por %p148, %p149
      %p151 = scmp.ne.s32.totalorder %s143, %s145
      %p152 = scmp.eq.s32.totalorder %s30, 1
      %p153 = por %p151, %p152
      %p154 = scmp.ne.s32.totalorder %s145, %s146
      %p155 = scmp.eq.s32.totalorder %s30, 0
      %p156 = por %p154, %p155
      %p157 = scmp.ne.s32.totalorder %s145, %s146
      %p158 = scmp.eq.s32.totalorder %s31, 1
      %p159 = por %p157, %p158
      %p161 = scmp.ne.s32.totalorder %s146, %s160
      %p162 = scmp.eq.s32.totalorder %s31, 0
      %p163 = por %p161, %p162
      %s165 = sadd.s32 %s164, 1
      %p168 = scmp.eq.s32.totalorder %s25, 1
      %p169 = scmp.ne.s32.totalorder %s164, %s166
      %p170 = scmp.eq.s32.totalorder %s25, 0
      %p171 = por %p169, %p170
      %p172 = scmp.ne.s32.totalorder %s164, %s166
      %p173 = scmp.eq.s32.totalorder %s30, 1
      %p174 = por %p172, %p173
      %p175 = scmp.ne.s32.totalorder %s166, %s167
      %p176 = scmp.eq.s32.totalorder %s30, 0
      %p177 = por %p175, %p176
      %p178 = scmp.ne.s32.totalorder %s166, %s167
      %p179 = scmp.eq.s32.totalorder %s31, 1
      %p180 = por %p178, %p179
      %p182 = scmp.ne.s32.totalorder %s167, %s181
      %p183 = scmp.eq.s32.totalorder %s31, 0
      %p184 = por %p182, %p183
      %s185 = ssub.s32 %s25, %s32
      %p186 = scmp.eq.s32.totalorder %s185, 0
      %s188 = sadd.s32 %s187, 1
      %s189 = scalar_select %p186, %s187, %s188
      %p192 = pneg %p186
      %p193 = scmp.eq.s32.totalorder %s25, 1
      %p194 = por %p192, %p193
      %p195 = scmp.ne.s32.totalorder %s187, %s190
      %p196 = scmp.eq.s32.totalorder %s25, 0
      %p197 = por %p195, %p196
      %p198 = scmp.ne.s32.totalorder %s187, %s190
      %p199 = scmp.eq.s32.totalorder %s30, 1
      %p200 = por %p198, %p199
      %p201 = scmp.ne.s32.totalorder %s190, %s191
      %p202 = scmp.eq.s32.totalorder %s30, 0
      %p203 = por %p201, %p202
      %p204 = scmp.ne.s32.totalorder %s190, %s191
      %p205 = scmp.eq.s32.totalorder %s31, 1
      %p206 = por %p204, %p205
      %p208 = scmp.ne.s32.totalorder %s191, %s207
      %p209 = scmp.eq.s32.totalorder %s31, 0
      %p210 = por %p208, %p209
      %s211 = ssub.s32 %s25, %s32
      %p212 = scmp.eq.s32.totalorder %s211, 0
      %s214 = sadd.s32 %s213, 1
      %s215 = scalar_select %p212, %s213, %s214
      %p218 = pneg %p212
      %p219 = scmp.eq.s32.totalorder %s25, 1
      %p220 = por %p218, %p219
      %p221 = scmp.ne.s32.totalorder %s213, %s216
      %p222 = scmp.eq.s32.totalorder %s25, 0
      %p223 = por %p221, %p222
      %p224 = scmp.ne.s32.totalorder %s213, %s216
      %p225 = scmp.eq.s32.totalorder %s30, 1
      %p226 = por %p224, %p225
      %p227 = scmp.ne.s32.totalorder %s216, %s217
      %p228 = scmp.eq.s32.totalorder %s30, 0
      %p229 = por %p227, %p228
      %p230 = scmp.ne.s32.totalorder %s216, %s217
      %p231 = scmp.eq.s32.totalorder %s31, 1
      %p232 = por %p230, %p231
      %p234 = scmp.ne.s32.totalorder %s217, %s233
      %p235 = scmp.eq.s32.totalorder %s31, 0
      %p236 = por %p234, %p235
      %p237 = scmp.le.s32.totalorder 1, %s25
      %p238 = scmp.lt.s32.totalorder %s25, 3
      %p239 = pnand %p237, %p238
      %p240 = pneg %p239
      // Predicated region
      $region9: #{tpu_custom_call.1} parent=5 // pred_check
        _
      $region10: #{tpu_custom_call.1} parent=5 // pred_check_branch
        %242 = sbr.rel (%p239) target = $region12
      $region11: #{tpu_custom_call.1} parent=5 // pred_region
        %s243 = ssub.s32 %s25, 1
        // Predicated region
        $region13: #{tpu_custom_call.1} parent=11 // pred_check
          %p244 = pneg %p72
        $region14: #{tpu_custom_call.1} parent=11 // pred_check_branch
          %246 = sbr.rel (%p244) target = $region16
        $region15: #{tpu_custom_call.1} parent=11 // pred_region
          %s248 = ssub.s32 2048, 2048
          %249 = vsyncadd [#allocation6], %s248
          %s250 = sshll.u32 [#allocation5], 4
          %s251 = int_to_ptr.vmem [resolvable:$true] %s250
          %256 = dma.hbm_to_vmem [thread:$0]  %s1, 2048, %s251, [#allocation6], 64, 64, 4
        $region16: #{tpu_custom_call.1} parent=11 // pred_fallthru
          _
        // Predicated region
        $region17: #{tpu_custom_call.1} parent=11 // pred_check
          %p257 = pneg %p93
        $region18: #{tpu_custom_call.1} parent=11 // pred_check_branch
          %259 = sbr.rel (%p257) target = $region20
        $region19: #{tpu_custom_call.1} parent=11 // pred_region
          _
        $region20: #{tpu_custom_call.1} parent=11 // pred_fallthru
          _
        // Predicated region
        $region21: #{tpu_custom_call.1} parent=11 // pred_check
          %p260 = pneg %p114
        $region22: #{tpu_custom_call.1} parent=11 // pred_check_branch
          %262 = sbr.rel (%p260) target = $region24
        $region23: #{tpu_custom_call.1} parent=11 // pred_region
          _
        $region24: #{tpu_custom_call.1} parent=11 // pred_fallthru
          _
        // Predicated region
        $region25: #{tpu_custom_call.1} parent=11 // pred_check
          %p263 = pneg %p135
        $region26: #{tpu_custom_call.1} parent=11 // pred_check_branch
          %265 = sbr.rel (%p263) target = $region28
        $region27: #{tpu_custom_call.1} parent=11 // pred_region
          _
        $region28: #{tpu_custom_call.1} parent=11 // pred_fallthru
          _
        // Predicated region
        $region29: #{tpu_custom_call.1} parent=11 // pred_check
          %p266 = pneg %p156
        $region30: #{tpu_custom_call.1} parent=11 // pred_check_branch
          %268 = sbr.rel (%p266) target = $region32
        $region31: #{tpu_custom_call.1} parent=11 // pred_region
          %s270 = ssub.s32 1024, 1024
          %271 = vsyncadd [#allocation6], %s270
          %s272 = sshll.u32 [#allocation7], 4
          %s273 = int_to_ptr.vmem [resolvable:$true] %s272
          %278 = dma.hbm_to_vmem [thread:$0]  %s5, 1024, %s273, [#allocation6], 64, 64, 4
        $region32: #{tpu_custom_call.1} parent=11 // pred_fallthru
          _
        // Predicated region
        $region33: #{tpu_custom_call.1} parent=11 // pred_check
          %p279 = pneg %p177
        $region34: #{tpu_custom_call.1} parent=11 // pred_check_branch
          %281 = sbr.rel (%p279) target = $region36
        $region35: #{tpu_custom_call.1} parent=11 // pred_region
          _
        $region36: #{tpu_custom_call.1} parent=11 // pred_fallthru
          _
      $region12: #{tpu_custom_call.1} parent=5 // pred_fallthru
        _
      %p282 = scmp.lt.s32.totalorder %s25, 2
      // Predicated region
      $region37: #{tpu_custom_call.1} parent=5 // pred_check
        %p283 = pneg %p282
      $region38: #{tpu_custom_call.1} parent=5 // pred_check_branch
        %285 = sbr.rel (%p283) target = $region40
      $region39: #{tpu_custom_call.1} parent=5 // pred_region
        // Predicated region
        $region41: #{tpu_custom_call.1} parent=39 // pred_check
          %p286 = pneg %p45
        $region42: #{tpu_custom_call.1} parent=39 // pred_check_branch
          %288 = sbr.rel (%p286) target = $region44
        $region43: #{tpu_custom_call.1} parent=39 // pred_region
          %s289 = sand.u32 %s35, 1
          %s290 = scalar_lea.sflag [#allocation3], %s289
          %s291 = sand.u32 %s35, 1
          %s292 = smul.addr %s291, 32
          %s293 = scalar_lea.vmem [#allocation2], %s292
          %s294 = smul.u32 4, %s25
          %s296 = ssub.s32 512, 512
          %297 = vsyncadd %s290, %s296
          %s298 = smul.addr %s294, 2
          %s299 = smul.addr %s298, 64
          %s300 = scalar_lea.hbm %s0, %s299
          %s301 = sshll.u32 %s293, 4
          %s302 = int_to_ptr.vmem [resolvable:$true] %s301
          %307 = dma.hbm_to_vmem [thread:$0]  %s300, 512, %s302, %s290, 128, 128, 8
        $region44: #{tpu_custom_call.1} parent=39 // pred_fallthru
          _
      $region40: #{tpu_custom_call.1} parent=5 // pred_fallthru
        _
      %p308 = scmp.le.s32.totalorder 1, %s25
      %p309 = scmp.lt.s32.totalorder %s25, 3
      %p310 = pnand %p308, %p309
      %p311 = pneg %p310
      // Predicated region
      $region45: #{tpu_custom_call.1} parent=5 // pred_check
        _
      $region46: #{tpu_custom_call.1} parent=5 // pred_check_branch
        %313 = sbr.rel (%p310) target = $region48
      $region47: #{tpu_custom_call.1} parent=5 // pred_region
        %s314 = ssub.s32 %s25, 1
        %s315 = sand.u32 %s38, 1
        %s316 = scalar_lea.sflag [#allocation3], %s315
        %s317 = sand.u32 %s38, 1
        %s318 = smul.addr %s317, 32
        %s319 = scalar_lea.vmem [#allocation2], %s318
        // Predicated region
        $region49: #{tpu_custom_call.1} parent=47 // pred_check
          %p320 = pneg %p51
        $region50: #{tpu_custom_call.1} parent=47 // pred_check_branch
          %322 = sbr.rel (%p320) target = $region52
        $region51: #{tpu_custom_call.1} parent=47 // pred_region
          %323 = dma.done %s316, 512
        $region52: #{tpu_custom_call.1} parent=47 // pred_fallthru
          _
        // Predicated region
        $region53: #{tpu_custom_call.1} parent=47 // pred_check
          %p324 = pneg %p72
        $region54: #{tpu_custom_call.1} parent=47 // pred_check_branch
          %326 = sbr.rel (%p324) target = $region56
        $region55: #{tpu_custom_call.1} parent=47 // pred_region
          %327 = dma.done [#allocation6], 2048
        $region56: #{tpu_custom_call.1} parent=47 // pred_fallthru
          _
        // Predicated region
        $region57: #{tpu_custom_call.1} parent=47 // pred_check
          %p328 = pneg %p156
        $region58: #{tpu_custom_call.1} parent=47 // pred_check_branch
          %330 = sbr.rel (%p328) target = $region60
        $region59: #{tpu_custom_call.1} parent=47 // pred_region
          %331 = dma.done [#allocation6], 1024
        $region60: #{tpu_custom_call.1} parent=47 // pred_fallthru
          _
        %s332 = sand.u32 %s38, 1
        %s333 = scalar_lea.sflag [#allocation3], %s332
        %s334 = sand.u32 %s38, 1
        %s335 = smul.addr %s334, 32
        %s336 = scalar_lea.vmem [#allocation2], %s335
        %p337 = pneg %p51
        %p338 = pneg %p48
        %p339 = pneg %p72
        %p340 = pneg %p69
        %p341 = pneg %p93
        %p342 = pneg %p90
        %p343 = pneg %p114
        %p344 = pneg %p111
        %p345 = pneg %p135
        %p346 = pneg %p132
        %p347 = pneg %p156
        %p348 = pneg %p153
        %p349 = pneg %p177
        %p350 = pneg %p174
        %p351 = pneg %p203
        %p352 = pneg %p200
        %s353 = sand.u32 %s190, 1
        %s354 = scalar_lea.sflag [#allocation4], %s353
        %s355 = sand.u32 %s190, 1
        %s356 = smul.addr %s355, 16
        %s357 = scalar_lea.vmem [#allocation8], %s356
        %p358 = pneg %p229
        %p359 = pneg %p226
        %s360 = sand.u32 %s216, 1
        %s361 = scalar_lea.sflag [#allocation10], %s360
        %s362 = sand.u32 %s216, 1
        %s363 = smul.addr %s362, 32
        %s364 = scalar_lea.vmem [#allocation9], %s363
        %s365 = smul.u32 4, %s30
        %s366 = smul.u32 4, %s30
        %s367 = smul.u32 4, %s30
        %v369 = vld [vmem:[%s319] sm:$0xff]
        %v370 = vld [vmem:[%s319 + $0x8] sm:$0xff]
        %v371 = vld [vmem:[%s319 + $0x10] sm:$0xff]
        %v372 = vld [vmem:[%s319 + $0x18] sm:$0xff]
        %v373 = vunpack.c.l.bf16 %v369
        %v374 = vunpack.c.h.bf16 %v369
        %v375 = vunpack.c.l.bf16 %v370
        %v376 = vunpack.c.h.bf16 %v370
        %v377 = vunpack.c.l.bf16 %v371
        %v378 = vunpack.c.h.bf16 %v371
        %v379 = vunpack.c.l.bf16 %v372
        %v380 = vunpack.c.h.bf16 %v372
        %v381 = vadd.f32 %v373, 1.0
        %v382 = vlog2.pop %v381
        %v383 = vmul.f32 %v382, 0.6931472
        %v384 = vmul.f32 -0.5, %v373
        %v385 = vadd.f32 %v384, 1.0
        %v386 = vmul.f32 %v385, %v373
        %v387 = vand.u32 2147483647, %v373
        %vm388 = vcmp.lt.f32.partialorder %v387, 0.0004427343
        %v389 = vsel %vm388, %v386, %v383
        %v390 = vadd.f32 %v374, 1.0
        %v391 = vlog2.pop %v390
        %v392 = vmul.f32 %v391, 0.6931472
        %v393 = vmul.f32 -0.5, %v374
        %v394 = vadd.f32 %v393, 1.0
        %v395 = vmul.f32 %v394, %v374
        %v396 = vand.u32 2147483647, %v374
        %vm397 = vcmp.lt.f32.partialorder %v396, 0.0004427343
        %v398 = vsel %vm397, %v395, %v392
        %v399 = vadd.f32 %v375, 1.0
        %v400 = vlog2.pop %v399
        %v401 = vmul.f32 %v400, 0.6931472
        %v402 = vmul.f32 -0.5, %v375
        %v403 = vadd.f32 %v402, 1.0
        %v404 = vmul.f32 %v403, %v375
        %v405 = vand.u32 2147483647, %v375
        %vm406 = vcmp.lt.f32.partialorder %v405, 0.0004427343
        %v407 = vsel %vm406, %v404, %v401
        %v408 = vadd.f32 %v376, 1.0
        %v409 = vlog2.pop %v408
        %v410 = vmul.f32 %v409, 0.6931472
        %v411 = vmul.f32 -0.5, %v376
        %v412 = vadd.f32 %v411, 1.0
        %v413 = vmul.f32 %v412, %v376
        %v414 = vand.u32 2147483647, %v376
        %vm415 = vcmp.lt.f32.partialorder %v414, 0.0004427343
        %v416 = vsel %vm415, %v413, %v410
        %v417 = vadd.f32 %v377, 1.0
        %v418 = vlog2.pop %v417
        %v419 = vmul.f32 %v418, 0.6931472
        %v420 = vmul.f32 -0.5, %v377
        %v421 = vadd.f32 %v420, 1.0
        %v422 = vmul.f32 %v421, %v377
        %v423 = vand.u32 2147483647, %v377
        %vm424 = vcmp.lt.f32.partialorder %v423, 0.0004427343
        %v425 = vsel %vm424, %v422, %v419
        %v426 = vadd.f32 %v378, 1.0
        %v427 = vlog2.pop %v426
        %v428 = vmul.f32 %v427, 0.6931472
        %v429 = vmul.f32 -0.5, %v378
        %v430 = vadd.f32 %v429, 1.0
        %v431 = vmul.f32 %v430, %v378
        %v432 = vand.u32 2147483647, %v378
        %vm433 = vcmp.lt.f32.partialorder %v432, 0.0004427343
        %v434 = vsel %vm433, %v431, %v428
        %v435 = vadd.f32 %v379, 1.0
        %v436 = vlog2.pop %v435
        %v437 = vmul.f32 %v436, 0.6931472
        %v438 = vmul.f32 -0.5, %v379
        %v439 = vadd.f32 %v438, 1.0
        %v440 = vmul.f32 %v439, %v379
        %v441 = vand.u32 2147483647, %v379
        %vm442 = vcmp.lt.f32.partialorder %v441, 0.0004427343
        %v443 = vsel %vm442, %v440, %v437
        %v444 = vadd.f32 %v380, 1.0
        %v445 = vlog2.pop %v444
        %v446 = vmul.f32 %v445, 0.6931472
        %v447 = vmul.f32 -0.5, %v380
        %v448 = vadd.f32 %v447, 1.0
        %v449 = vmul.f32 %v448, %v380
        %v450 = vand.u32 2147483647, %v380
        %vm451 = vcmp.lt.f32.partialorder %v450, 0.0004427343
        %v452 = vsel %vm451, %v449, %v446
        %v453 = vpack.c.bf16 %v407, %v389
        %v454 = vpack.c.bf16 %v416, %v398
        %v455 = vpack.c.bf16 %v443, %v425
        %v456 = vpack.c.bf16 %v452, %v434
        %v457 = vld [vmem:[#allocation5] sm:$0xf]
        %v458 = vld [vmem:[#allocation5 + $0x4] sm:$0xf]
        %v459 = vld [vmem:[#allocation5 + $0x8] sm:$0xf]
        %v460 = vld [vmem:[#allocation5 + $0xc] sm:$0xf]
        %v461 = vld [vmem:[#allocation5 + $0x10] sm:$0xf]
        %v462 = vld [vmem:[#allocation5 + $0x14] sm:$0xf]
        %v463 = vld [vmem:[#allocation5 + $0x18] sm:$0xf]
        %v464 = vld [vmem:[#allocation5 + $0x1c] sm:$0xf]
        %v465 = vld [vmem:[#allocation5 + $0x20] sm:$0xf]
        %v466 = vld [vmem:[#allocation5 + $0x24] sm:$0xf]
        %v467 = vld [vmem:[#allocation5 + $0x28] sm:$0xf]
        %v468 = vld [vmem:[#allocation5 + $0x2c] sm:$0xf]
        %v469 = vld [vmem:[#allocation5 + $0x30] sm:$0xf]
        %v470 = vld [vmem:[#allocation5 + $0x34] sm:$0xf]
        %v471 = vld [vmem:[#allocation5 + $0x38] sm:$0xf]
        %v472 = vld [vmem:[#allocation5 + $0x3c] sm:$0xf]
        %v473 = vld [vmem:[#allocation5 + $0x40] sm:$0xf]
        %v474 = vld [vmem:[#allocation5 + $0x44] sm:$0xf]
        %v475 = vld [vmem:[#allocation5 + $0x48] sm:$0xf]
        %v476 = vld [vmem:[#allocation5 + $0x4c] sm:$0xf]
        %v477 = vld [vmem:[#allocation5 + $0x50] sm:$0xf]
        %v478 = vld [vmem:[#allocation5 + $0x54] sm:$0xf]
        %v479 = vld [vmem:[#allocation5 + $0x58] sm:$0xf]
        %v480 = vld [vmem:[#allocation5 + $0x5c] sm:$0xf]
        %v481 = vld [vmem:[#allocation5 + $0x60] sm:$0xf]
        %v482 = vld [vmem:[#allocation5 + $0x64] sm:$0xf]
        %v483 = vld [vmem:[#allocation5 + $0x68] sm:$0xf]
        %v484 = vld [vmem:[#allocation5 + $0x6c] sm:$0xf]
        %v485 = vld [vmem:[#allocation5 + $0x70] sm:$0xf]
        %v486 = vld [vmem:[#allocation5 + $0x74] sm:$0xf]
        %v487 = vld [vmem:[#allocation5 + $0x78] sm:$0xf]
        %v488 = vld [vmem:[#allocation5 + $0x7c] sm:$0xf]
        %v489 = vld [vmem:[%s2] sm:$0x1]
        %v491 = vlaneseq
        %v492 = vshrl.u32 %v491, 7
        %v493 = vsub.s32 0, %v492
        %v494 = vrot.slane %v489, %v493
        %v528 = vunpack.c.l.b16 %v457
        %v529 = vunpack.c.l.b16 %v458
        %v530 = vunpack.c.l.b16 %v459
        %v531 = vunpack.c.l.b16 %v460
        %v532 = vunpack.c.l.b16 %v461
        %v533 = vunpack.c.l.b16 %v462
        %v534 = vunpack.c.l.b16 %v463
        %v535 = vunpack.c.l.b16 %v464
        %v536 = vunpack.c.l.b16 %v465
        %v537 = vunpack.c.l.b16 %v466
        %v538 = vunpack.c.l.b16 %v467
        %v539 = vunpack.c.l.b16 %v468
        %v540 = vunpack.c.l.b16 %v469
        %v541 = vunpack.c.l.b16 %v470
        %v542 = vunpack.c.l.b16 %v471
        %v543 = vunpack.c.l.b16 %v472
        %v544 = vunpack.c.l.b16 %v473
        %v545 = vunpack.c.l.b16 %v474
        %v546 = vunpack.c.l.b16 %v475
        %v547 = vunpack.c.l.b16 %v476
        %v548 = vunpack.c.l.b16 %v477
        %v549 = vunpack.c.l.b16 %v478
        %v550 = vunpack.c.l.b16 %v479
        %v551 = vunpack.c.l.b16 %v480
        %v552 = vunpack.c.l.b16 %v481
        %v553 = vunpack.c.l.b16 %v482
        %v554 = vunpack.c.l.b16 %v483
        %v555 = vunpack.c.l.b16 %v484
        %v556 = vunpack.c.l.b16 %v485
        %v557 = vunpack.c.l.b16 %v486
        %v558 = vunpack.c.l.b16 %v487
        %v559 = vunpack.c.l.b16 %v488
        %v560 = vpack.c.b16 %v529, %v528
        %v561 = vpack.c.b16 %v531, %v530
        %v562 = vpack.c.b16 %v533, %v532
        %v563 = vpack.c.b16 %v535, %v534
        %v564 = vpack.c.b16 %v537, %v536
        %v565 = vpack.c.b16 %v539, %v538
        %v566 = vpack.c.b16 %v541, %v540
        %v567 = vpack.c.b16 %v543, %v542
        %v568 = vpack.c.b16 %v545, %v544
        %v569 = vpack.c.b16 %v547, %v546
        %v570 = vpack.c.b16 %v549, %v548
        %v571 = vpack.c.b16 %v551, %v550
        %v572 = vpack.c.b16 %v553, %v552
        %v573 = vpack.c.b16 %v555, %v554
        %v574 = vpack.c.b16 %v557, %v556
        %v575 = vpack.c.b16 %v559, %v558
        %592 = vmatprep.subr.bf16.mxu0 0
        %593 = vmatpush1.bf16.msra.mxu0 %v560
        %594 = vmatprep.subr.bf16.mxu0 0
        %595 = vmatpush1.bf16.msra.mxu0 %v561
        %596 = vmatprep.subr.bf16.mxu0 0
        %597 = vmatpush1.bf16.msra.mxu0 %v562
        %598 = vmatprep.subr.bf16.mxu0 0
        %599 = vmatpush1.bf16.msra.mxu0 %v563
        %600 = vmatprep.subr.bf16.mxu0 0
        %601 = vmatpush1.bf16.msra.mxu0 %v564
        %602 = vmatprep.subr.bf16.mxu0 0
        %603 = vmatpush1.bf16.msra.mxu0 %v565
        %604 = vmatprep.subr.bf16.mxu0 0
        %605 = vmatpush1.bf16.msra.mxu0 %v566
        %606 = vmatprep.subr.bf16.mxu0 0
        %607 = vmatpush1.bf16.msra.mxu0 %v567
        %608 = vmatprep.subr.bf16.mxu0 0
        %609 = vmatpush1.bf16.msra.mxu0 %v568
        %610 = vmatprep.subr.bf16.mxu0 0
        %611 = vmatpush1.bf16.msra.mxu0 %v569
        %612 = vmatprep.subr.bf16.mxu0 0
        %613 = vmatpush1.bf16.msra.mxu0 %v570
        %614 = vmatprep.subr.bf16.mxu0 0
        %615 = vmatpush1.bf16.msra.mxu0 %v571
        %616 = vmatprep.subr.bf16.mxu0 0
        %617 = vmatpush1.bf16.msra.mxu0 %v572
        %618 = vmatprep.subr.bf16.mxu0 0
        %619 = vmatpush1.bf16.msra.mxu0 %v573
        %620 = vmatprep.subr.bf16.mxu0 0
        %621 = vmatpush1.bf16.msra.mxu0 %v574
        %622 = vmatprep.subr.bf16.mxu0 0
        %623 = vmatpush1.bf16.msra.mxu0 %v575
        %624 = vmatprep.mubr.bf16.mxu0 %v454
        %625 = vmatmul.mubr.bf16.gmra.mrb[0].mxu0 %v453
        %v626 = vpop.f32.mrb[0].mxu0
        %v627 = vadd.f32 %v494, %v626
        %v628 = vpop.f32.mrb[0].mxu0
        %v629 = vpop.f32.mrb[0].mxu0
        %v630 = vadd.f32 %v494, %v629
        %v631 = vpop.f32.mrb[0].mxu0
        %632 = vmatprep.mubr.bf16.mxu0 %v456
        %633 = vmatmul.mubr.bf16.gmra.mrb[0].mxu0 %v455
        %v634 = vpop.f32.mrb[0].mxu0
        %v635 = vadd.f32 %v494, %v634
        %v636 = vpop.f32.mrb[0].mxu0
        %v637 = vpop.f32.mrb[0].mxu0
        %v638 = vadd.f32 %v494, %v637
        %v639 = vpop.f32.mrb[0].mxu0
        %640 = vdwg.mxu0
        %641 = vadd.xlane.f32.xlu0 %v627
        %v642 = vpop.xlane.xlu0 %641
        %643 = vadd.xlane.f32.xlu0 %v630
        %v644 = vpop.xlane.xlu0 %643
        %645 = vadd.xlane.f32.xlu0 %v635
        %v646 = vpop.xlane.xlu0 %645
        %647 = vadd.xlane.f32.xlu0 %v638
        %v648 = vpop.xlane.xlu0 %647
        %v649 = vrcp.pop 128.0
        %v650 = vmul.f32 %v642, %v649
        %v651 = vmul.f32 %v644, %v649
        %v652 = vmul.f32 %v646, %v649
        %v653 = vmul.f32 %v648, %v649
        %v654 = vsub.f32 %v627, %v650
        %v655 = vsub.f32 %v630, %v651
        %v656 = vsub.f32 %v635, %v652
        %v657 = vsub.f32 %v638, %v653
        %v658 = vmul.f32 %v654, %v654
        %v659 = vmul.f32 %v655, %v655
        %v660 = vmul.f32 %v656, %v656
        %v661 = vmul.f32 %v657, %v657
        %662 = vadd.xlane.f32.xlu0 %v658
        %v663 = vpop.xlane.xlu0 %662
        %664 = vadd.xlane.f32.xlu0 %v659
        %v665 = vpop.xlane.xlu0 %664
        %666 = vadd.xlane.f32.xlu0 %v660
        %v667 = vpop.xlane.xlu0 %666
        %668 = vadd.xlane.f32.xlu0 %v661
        %v669 = vpop.xlane.xlu0 %668
        %v670 = vmul.f32 %v663, %v649
        %v671 = vmul.f32 %v665, %v649
        %v672 = vmul.f32 %v667, %v649
        %v673 = vmul.f32 %v669, %v649
        %v674 = vadd.f32 %v670, 1e-05
        %v675 = vadd.f32 %v671, 1e-05
        %v676 = vadd.f32 %v672, 1e-05
        %v677 = vadd.f32 %v673, 1e-05
        %v678 = vrsqrt.pop %v674
        %v679 = vrsqrt.pop %v675
        %v680 = vrsqrt.pop %v676
        %v681 = vrsqrt.pop %v677
        %v682 = vmul.f32 %v654, %v678
        %v683 = vmul.f32 %v655, %v679
        %v684 = vmul.f32 %v656, %v680
        %v685 = vmul.f32 %v657, %v681
        %v686 = vld [vmem:[%s3] sm:$0x1]
        %v688 = vlaneseq
        %v689 = vshrl.u32 %v688, 7
        %v690 = vsub.s32 0, %v689
        %v691 = vrot.slane %v686, %v690
        %v693 = vmul.f32 %v682, %v691
        %v694 = vmul.f32 %v683, %v691
        %v695 = vmul.f32 %v684, %v691
        %v696 = vmul.f32 %v685, %v691
        %v697 = vld [vmem:[%s4] sm:$0x1]
        %v699 = vlaneseq
        %v700 = vshrl.u32 %v699, 7
        %v701 = vsub.s32 0, %v700
        %v702 = vrot.slane %v697, %v701
        %v704 = vadd.f32 %v693, %v702
        %v705 = vadd.f32 %v694, %v702
        %v706 = vadd.f32 %v695, %v702
        %v707 = vadd.f32 %v696, %v702
        %v708 = vmax.f32 %v704, 0.0
        %v709 = vmax.f32 %v705, 0.0
        %v710 = vmax.f32 %v706, 0.0
        %v711 = vmax.f32 %v707, 0.0
        %v712 = vpack.c.bf16 %v709, %v708
        %v713 = vpack.c.bf16 %v711, %v710
        %v716 = vunpack.c.l.b16 %v712
        %v717 = vunpack.c.h.b16 %v712
        %v718 = vunpack.c.l.b16 %v713
        %v719 = vunpack.c.h.b16 %v713
        %v720 = vpack.c.b16 %v716, %v716
        %v721 = vpack.c.b16 %v717, %v717
        %v722 = vpack.c.b16 %v718, %v718
        %v723 = vpack.c.b16 %v719, %v719
        %728 = vst [vmem:[%s357] sm:$0xf] %v720
        %729 = vst [vmem:[%s357 + $0x4] sm:$0xf] %v721
        %730 = vst [vmem:[%s357 + $0x8] sm:$0xf] %v722
        %731 = vst [vmem:[%s357 + $0xc] sm:$0xf] %v723
        %v732 = vld [vmem:[#allocation7] sm:$0xf]
        %v733 = vld [vmem:[#allocation7 + $0x4] sm:$0xf]
        %v734 = vld [vmem:[#allocation7 + $0x8] sm:$0xf]
        %v735 = vld [vmem:[#allocation7 + $0xc] sm:$0xf]
        %v736 = vld [vmem:[#allocation7 + $0x10] sm:$0xf]
        %v737 = vld [vmem:[#allocation7 + $0x14] sm:$0xf]
        %v738 = vld [vmem:[#allocation7 + $0x18] sm:$0xf]
        %v739 = vld [vmem:[#allocation7 + $0x1c] sm:$0xf]
        %v740 = vld [vmem:[#allocation7 + $0x20] sm:$0xf]
        %v741 = vld [vmem:[#allocation7 + $0x24] sm:$0xf]
        %v742 = vld [vmem:[#allocation7 + $0x28] sm:$0xf]
        %v743 = vld [vmem:[#allocation7 + $0x2c] sm:$0xf]
        %v744 = vld [vmem:[#allocation7 + $0x30] sm:$0xf]
        %v745 = vld [vmem:[#allocation7 + $0x34] sm:$0xf]
        %v746 = vld [vmem:[#allocation7 + $0x38] sm:$0xf]
        %v747 = vld [vmem:[#allocation7 + $0x3c] sm:$0xf]
        %v748 = vld [vmem:[%s6] sm:$0x1]
        %v750 = vlaneseq
        %v751 = vshrl.u32 %v750, 7
        %v752 = vsub.s32 0, %v751
        %v753 = vrot.slane %v748, %v752
        %v771 = vunpack.c.l.b16 %v732
        %v772 = vunpack.c.l.b16 %v733
        %v773 = vunpack.c.l.b16 %v734
        %v774 = vunpack.c.l.b16 %v735
        %v775 = vunpack.c.l.b16 %v736
        %v776 = vunpack.c.l.b16 %v737
        %v777 = vunpack.c.l.b16 %v738
        %v778 = vunpack.c.l.b16 %v739
        %v779 = vunpack.c.l.b16 %v740
        %v780 = vunpack.c.l.b16 %v741
        %v781 = vunpack.c.l.b16 %v742
        %v782 = vunpack.c.l.b16 %v743
        %v783 = vunpack.c.l.b16 %v744
        %v784 = vunpack.c.l.b16 %v745
        %v785 = vunpack.c.l.b16 %v746
        %v786 = vunpack.c.l.b16 %v747
        %v787 = vpack.c.b16 %v772, %v771
        %v788 = vpack.c.b16 %v774, %v773
        %v789 = vpack.c.b16 %v776, %v775
        %v790 = vpack.c.b16 %v778, %v777
        %v791 = vpack.c.b16 %v780, %v779
        %v792 = vpack.c.b16 %v782, %v781
        %v793 = vpack.c.b16 %v784, %v783
        %v794 = vpack.c.b16 %v786, %v785
        %803 = vmatprep.subr.bf16.mxu0 0
        %804 = vmatpush1.bf16.msra.mxu0 %v787
        %805 = vmatprep.subr.bf16.mxu0 0
        %806 = vmatpush1.bf16.msra.mxu0 %v788
        %807 = vmatprep.subr.bf16.mxu0 0
        %808 = vmatpush1.bf16.msra.mxu0 %v789
        %809 = vmatprep.subr.bf16.mxu0 0
        %810 = vmatpush1.bf16.msra.mxu0 %v790
        %811 = vmatprep.subr.bf16.mxu0 0
        %812 = vmatpush1.bf16.msra.mxu0 %v791
        %813 = vmatprep.subr.bf16.mxu0 0
        %814 = vmatpush1.bf16.msra.mxu0 %v792
        %815 = vmatprep.subr.bf16.mxu0 0
        %816 = vmatpush1.bf16.msra.mxu0 %v793
        %817 = vmatprep.subr.bf16.mxu0 0
        %818 = vmatpush1.bf16.msra.mxu0 %v794
        %819 = vmatprep.subr.bf16.mxu0 0
        %820 = vmatpush1.bf16.msra.mxu0 0
        %821 = vmatprep.subr.bf16.mxu0 0
        %822 = vmatpush1.bf16.msra.mxu0 0
        %823 = vmatprep.subr.bf16.mxu0 0
        %824 = vmatpush1.bf16.msra.mxu0 0
        %825 = vmatprep.subr.bf16.mxu0 0
        %826 = vmatpush1.bf16.msra.mxu0 0
        %827 = vmatprep.subr.bf16.mxu0 0
        %828 = vmatpush1.bf16.msra.mxu0 0
        %829 = vmatprep.subr.bf16.mxu0 0
        %830 = vmatpush1.bf16.msra.mxu0 0
        %831 = vmatprep.subr.bf16.mxu0 0
        %832 = vmatpush1.bf16.msra.mxu0 0
        %833 = vmatprep.subr.bf16.mxu0 0
        %834 = vmatpush1.bf16.msra.mxu0 0
        %835 = vmatprep.mubr.bf16.mxu0 0
        %836 = vmatmul.mubr.bf16.gmra.mrb[0].mxu0 %v712
        %v837 = vpop.f32.mrb[0].mxu0
        %v838 = vadd.f32 %v753, %v837
        %v839 = vpop.f32.mrb[0].mxu0
        %v840 = vpop.f32.mrb[0].mxu0
        %v841 = vadd.f32 %v753, %v840
        %v842 = vpop.f32.mrb[0].mxu0
        %843 = vmatprep.mubr.bf16.mxu0 0
        %844 = vmatmul.mubr.bf16.gmra.mrb[0].mxu0 %v713
        %v845 = vpop.f32.mrb[0].mxu0
        %v846 = vadd.f32 %v753, %v845
        %v847 = vpop.f32.mrb[0].mxu0
        %v848 = vpop.f32.mrb[0].mxu0
        %v849 = vadd.f32 %v753, %v848
        %v850 = vpop.f32.mrb[0].mxu0
        %851 = vdwg.mxu0
        %852 = vst [vmem:[%s364] sm:$0xff] %v838
        %853 = vst [vmem:[%s364 + $0x8] sm:$0xff] %v841
        %854 = vst [vmem:[%s364 + $0x10] sm:$0xff] %v846
        %855 = vst [vmem:[%s364 + $0x18] sm:$0xff] %v849
        %s856 = sand.u32 %s190, 1
        %s857 = scalar_lea.sflag [#allocation4], %s856
        %s858 = sand.u32 %s190, 1
        %s859 = smul.addr %s858, 16
        %s860 = scalar_lea.vmem [#allocation8], %s859
        %s861 = sand.u32 %s216, 1
        %s862 = scalar_lea.sflag [#allocation10], %s861
        %s863 = sand.u32 %s216, 1
        %s864 = smul.addr %s863, 32
        %s865 = scalar_lea.vmem [#allocation9], %s864
        // Predicated region
        $region61: #{tpu_custom_call.1} parent=47 // pred_check
          %p866 = pneg %p200
        $region62: #{tpu_custom_call.1} parent=47 // pred_check_branch
          %868 = sbr.rel (%p866) target = $region64
        $region63: #{tpu_custom_call.1} parent=47 // pred_region
          %s869 = smul.u32 4, %s30
          %s871 = ssub.s32 256, 256
          %872 = vsyncadd %s857, %s871
          %s873 = smul.addr %s869, 64
          %s874 = scalar_lea.hbm %s7, %s873
          %s875 = sshll.u32 %s860, 4
          %s876 = int_to_ptr.vmem [resolvable:$true] %s875
          %881 = dma.vmem_to_hbm [thread:$0]  %s876, 256, %s874, %s857, 64, 64, 4
        $region64: #{tpu_custom_call.1} parent=47 // pred_fallthru
          _
        // Predicated region
        $region65: #{tpu_custom_call.1} parent=47 // pred_check
          %p882 = pneg %p226
        $region66: #{tpu_custom_call.1} parent=47 // pred_check_branch
          %884 = sbr.rel (%p882) target = $region68
        $region67: #{tpu_custom_call.1} parent=47 // pred_region
          %s885 = smul.u32 4, %s30
          %s887 = ssub.s32 512, 512
          %888 = vsyncadd %s862, %s887
          %s889 = smul.addr %s885, 128
          %s890 = scalar_lea.hbm %s8, %s889
          %s891 = sshll.u32 %s865, 4
          %s892 = int_to_ptr.vmem [resolvable:$true] %s891
          %897 = dma.vmem_to_hbm [thread:$0]  %s892, 512, %s890, %s862, 128, 128, 8
        $region68: #{tpu_custom_call.1} parent=47 // pred_fallthru
          _
      $region48: #{tpu_custom_call.1} parent=5 // pred_fallthru
        _
      %p898 = scmp.le.s32.totalorder 2, %s25
      // Predicated region
      $region69: #{tpu_custom_call.1} parent=5 // pred_check
        %p899 = pneg %p898
      $region70: #{tpu_custom_call.1} parent=5 // pred_check_branch
        %901 = sbr.rel (%p899) target = $region72
      $region71: #{tpu_custom_call.1} parent=5 // pred_region
        %s902 = ssub.s32 %s25, 2
        // Predicated region
        $region73: #{tpu_custom_call.1} parent=71 // pred_check
          %p903 = pneg %p206
        $region74: #{tpu_custom_call.1} parent=71 // pred_check_branch
          %905 = sbr.rel (%p903) target = $region76
        $region75: #{tpu_custom_call.1} parent=71 // pred_region
          %s906 = sand.u32 %s191, 1
          %s907 = scalar_lea.sflag [#allocation4], %s906
          %s908 = sand.u32 %s191, 1
          %s909 = smul.addr %s908, 16
          %s910 = scalar_lea.vmem [#allocation8], %s909
          %911 = dma.done %s907, 256
        $region76: #{tpu_custom_call.1} parent=71 // pred_fallthru
          _
        // Predicated region
        $region77: #{tpu_custom_call.1} parent=71 // pred_check
          %p912 = pneg %p232
        $region78: #{tpu_custom_call.1} parent=71 // pred_check_branch
          %914 = sbr.rel (%p912) target = $region80
        $region79: #{tpu_custom_call.1} parent=71 // pred_region
          %s915 = sand.u32 %s217, 1
          %s916 = scalar_lea.sflag [#allocation10], %s915
          %s917 = sand.u32 %s217, 1
          %s918 = smul.addr %s917, 32
          %s919 = scalar_lea.vmem [#allocation9], %s918
          %920 = dma.done %s916, 512
        $region80: #{tpu_custom_call.1} parent=71 // pred_fallthru
          _
      $region72: #{tpu_custom_call.1} parent=5 // pred_fallthru
        _
    $region6: #{tpu_custom_call.1} parent=1 // loop_footer
      %s29 = sadd.s32 1, %s25
    $region7: #{tpu_custom_call.1} parent=1 // loop_footer_branch
      %24 = sbr.rel target = $region3
    $region8: #{tpu_custom_call.1} parent=1 // loop_exit
      _
    %921 = vsyncpa [#allocation3], 1
    %s922 = scalar_lea.sflag [#allocation3], 1
    %923 = vsyncpa %s922, 1
    %924 = vsyncpa [#allocation6], 1
    %925 = vsyncpa [#allocation4], 1
    %s926 = scalar_lea.sflag [#allocation4], 1
    %927 = vsyncpa %s926, 1
    %928 = vsyncpa [#allocation10], 1
    %s929 = scalar_lea.sflag [#allocation10], 1
    %930 = vsyncpa %s929, 1

</llo_original>
